<compile_context>
chip_gen: v6e
topology: v6e:2x2x1
jax: 0.10.0
libtpu: 0.0.40
codegen_flags: <defaults>
</compile_context>

<pallas_src>
import functools

import jax
import jax.numpy as jnp
from jax.experimental import pallas as pl
from jax.experimental.pallas import tpu as pltpu


def attention_kernel(x_ref, wqkv_ref, bqkv_ref, w1_ref, b1_ref, o_ref, *,
                     seq_len, heads, scale):
    rows, dim = x_ref.shape                 # rows = block_b * seq_len
    n = seq_len
    bb = rows // n
    d = dim // heads

    x = x_ref[...]                          # native dtype -> MXU-native path

    # --- Fused QKV projection: one tall (rows, D) @ (D, 3D) MXU matmul, f32 accumulate.
    qkv = jnp.dot(x, wqkv_ref[...], preferred_element_type=jnp.float32)
    qkv = qkv + bqkv_ref[...]                                        # (rows, 3D) f32

    # Softmax scale folded into q while it is still f32 (no extra low-precision
    # rounding, and a (rows, D) multiply instead of an (N, N) one per head).
    q = (qkv[:, 0 * dim:1 * dim] * scale).astype(x.dtype)
    k = qkv[:, 1 * dim:2 * dim].astype(x.dtype)
    v = qkv[:, 2 * dim:3 * dim].astype(x.dtype)

    # --- Head split 'b n (h d) -> (h b) n d':
    # H lane slices + one leading-axis stack (the minimal rearrange cost — no
    # per-(batch, head) unroll), then a tile-aligned leading/sublane reshape
    # (free when n % 8 == 0, which _pick_block_b enforces whenever bb > 1).
    def to_heads(t):
        th = jnp.stack([t[:, h * d:(h + 1) * d] for h in range(heads)], axis=0)  # (H, rows, d)
        if bb > 1:
            th = th.reshape(heads * bb, n, d)
        return th

    qh, kh, vh = to_heads(q), to_heads(k), to_heads(v)

    # --- Batched attention over all (head, batch) pairs at once; contraction
    # over d (no explicit k transpose), f32 scores.
    dots = jnp.einsum('gnd,gmd->gnm', qh, kh,
                      preferred_element_type=jnp.float32)            # (g, n, n) f32
    m = jnp.max(dots, axis=-1, keepdims=True)
    p = jnp.exp(dots - m)
    denom = jnp.sum(p, axis=-1, keepdims=True)                       # (g, n, 1) f32

    # PV matmul on the UNnormalized probabilities, then normalize the (g, n, d)
    # output — the scaling work shrinks by ~n/d and one (g, n, n) temp goes away.
    out = jnp.einsum('gnm,gmd->gnd', p.astype(vh.dtype), vh,
                     preferred_element_type=jnp.float32)             # (g, n, d) f32
    out = out * pl.reciprocal(denom, approx=False)   # exact recip on (g, n, 1): nearly free
    out = out.astype(x.dtype)

    # --- Merge heads '(h b) n d -> (b n) (h d)': one lane-axis concat of H pieces.
    if bb > 1:
        out = out.reshape(heads, rows, d)
    merged = jnp.concatenate([out[h] for h in range(heads)], axis=-1)   # (rows, dim)

    # --- Output projection (nn1), f32 accumulate, cast back to output dtype.
    y = jnp.dot(merged, w1_ref[...], preferred_element_type=jnp.float32) + b1_ref[...]
    # TODO(synk): self.do1 (Dropout) is identity in eval mode; no RNG applied.
    o_ref[...] = y.astype(o_ref.dtype)


def _pick_block_b(B, N, D, heads, vmem_limit_bytes, itemsize):
    """Batch elements per grid step.

    Picks the largest block that fits an (accurate-ish) VMEM model while
    (a) keeping >= 2 grid steps when B >= 2 (so v7x's 2 TensorCores both work),
    (b) preferring rows = block_b*N that are multiples of 256 (MXU-friendly M on
        v6e/v7x, also 128-aligned for v5e), and
    (c) keeping the in-kernel head reshape tile-aligned (N % 8 == 0 when bb > 1).
    """
    d = D // heads
    d_pad = -(-d // 128) * 128          # per-head tensors are lane-padded to 128
    n_pad = -(-N // 8) * 8
    f32 = 4

    # Single-buffered weights/biases (pl.Buffered(1)): block_b-independent cost.
    fixed = itemsize * (D * 3 * D + 3 * D + D * D + D)

    def body_bytes(b):
        rows = b * n_pad
        g = b * heads
        qkv = rows * 3 * D * (f32 + itemsize)          # f32 qkv slab + q/k/v casts
        headed = 3 * g * n_pad * d_pad * itemsize      # qh/kh/vh (lane padded to 128)
        scores = 2 * g * n_pad * n_pad * f32           # dots + p (f32)
        pv = g * n_pad * d_pad * (f32 + itemsize)      # PV output (f32 + cast)
        proj = rows * D * (itemsize + f32)             # merged + y
        io = 2 * 2 * rows * D * itemsize               # double-buffered x / out blocks
        return fixed + qkv + headed + scores + pv + proj + io

    budget = int(0.6 * vmem_limit_bytes)               # headroom for Mosaic scratch/spills

    def valid(b):
        if B % b:
            return False
        if b < B and (b * N) % 8:
            return False                # (8, 128) block-shape rule on the (B*N, D) array
        if b > 1 and N % 8:
            return False                # keep the in-kernel head reshape tile-aligned
        return body_bytes(b) <= budget

    cands = [b for b in range(1, B + 1) if valid(b)]
    if not cands:
        # Nothing fits the model (or awkward N): fall back to the always-legal choice.
        # TODO(synk): for long sequences the dense (g, N, N) f32 scores should switch
        # to a flash-style query/KV tiling with an online softmax.
        return 1 if (N % 8 == 0 or B == 1) else B
    if B >= 2:
        multi = [b for b in cands if B // b >= 2]      # >= 2 parallel steps for v7x's 2 TCs
        if multi:
            cands = multi
    aligned = [b for b in cands if (b * N) % 256 == 0]  # 256x256 MXU M-dim fill (v6e/v7x)
    pool = aligned if aligned else cands
    return max(pool)


def attention_forward(x, wqkv, bqkv, w1, b1, *, heads, block_b=None):
    """x: (B, N, D); wqkv: (D, 3D); bqkv: (3D,); w1: (D, D); b1: (D,)."""
    B, N, D = x.shape
    assert D % heads == 0
    scale = float(D) ** -0.5            # PyTorch Attention: dim ** -0.5 (full embed dim) — intentional
    itemsize = jnp.dtype(x.dtype).itemsize

    # Generation-aware VMEM limit: fine on v5e/v6e (128 MiB physical), and still
    # leaves headroom on v7x's 64 MiB per-TC VMEM.
    try:
        vmem_cap = int(pltpu.get_tpu_info().vmem_capacity_bytes)
    except Exception:
        vmem_cap = 128 * 1024 * 1024
    vmem_limit = max(16 * 1024 * 1024, min(48 * 1024 * 1024, int(0.55 * vmem_cap)))

    if block_b is None:
        block_b = _pick_block_b(B, N, D, heads, vmem_limit, itemsize)
    rows = block_b * N
    n_steps = (B * N) // rows

    kernel = functools.partial(attention_kernel, seq_len=N, heads=heads, scale=scale)
    # Weights/biases have constant index_maps (fetched once) — single VMEM buffer.
    wmode = dict(pipeline_mode=pl.Buffered(1))

    out2 = pl.pallas_call(
        kernel,
        out_shape=jax.ShapeDtypeStruct((B * N, D), x.dtype),
        grid_spec=pltpu.PrefetchScalarGridSpec(
            num_scalar_prefetch=0,
            grid=(n_steps,),
            in_specs=[
                pl.BlockSpec((rows, D), lambda i: (i, 0)),            # x rows (double-buffered)
                pl.BlockSpec((D, 3 * D), lambda i: (0, 0), **wmode),  # Wqkv
                pl.BlockSpec((1, 3 * D), lambda i: (0, 0), **wmode),  # bqkv
                pl.BlockSpec((D, D), lambda i: (0, 0), **wmode),      # W1
                pl.BlockSpec((1, D), lambda i: (0, 0), **wmode),      # b1
            ],
            out_specs=pl.BlockSpec((rows, D), lambda i: (i, 0)),
        ),
        compiler_params=pltpu.CompilerParams(
            dimension_semantics=("parallel",),
            vmem_limit_bytes=vmem_limit),
    )(x.reshape(B * N, D), wqkv, bqkv.reshape(1, 3 * D), w1, b1.reshape(1, D))
    return out2.reshape(B, N, D)


def attention_reference(x, wqkv, bqkv, w1, b1, *, heads):
    B, N, D = x.shape
    d = D // heads
    scale = float(D) ** -0.5
    qkv = jnp.einsum('bnd,de->bne', x, wqkv) + bqkv
    q, k, v = jnp.split(qkv, 3, axis=-1)

    def to_heads(t):
        return t.reshape(B, N, heads, d).transpose(0, 2, 1, 3)   # (B, H, N, d)

    q, k, v = map(to_heads, (q, k, v))
    dots = jnp.einsum('bhid,bhjd->bhij', q, k) * scale
    attn = jax.nn.softmax(dots, axis=-1)
    out = jnp.einsum('bhij,bhjd->bhid', attn, v)
    out = out.transpose(0, 2, 1, 3).reshape(B, N, D)
    return jnp.einsum('bnd,de->bne', out, w1) + b1


if __name__ == "__main__":
    B, N, D, H = 2, 8, 32, 8   # batch, seq, dim, heads (d = 4 per head)
    key = jax.random.PRNGKey(0)
    kx, k1, k2, k3, k4 = jax.random.split(key, 5)

    x = jax.random.normal(kx, (B, N, D), dtype=jnp.float32)
    # Deterministic synthetic parameters (PyTorch-Linear-like uniform init).
    bound = 1.0 / (D ** 0.5)
    wqkv = jax.random.uniform(k1, (D, 3 * D), jnp.float32, -bound, bound)
    bqkv = jax.random.uniform(k2, (3 * D,), jnp.float32, -bound, bound)
    w1 = jax.random.uniform(k3, (D, D), jnp.float32, -bound, bound)
    b1 = jax.random.uniform(k4, (D,), jnp.float32, -bound, bound)

    out = attention_forward(x, wqkv, bqkv, w1, b1, heads=H)
    out = jax.block_until_ready(out)

    ref = attention_reference(x, wqkv, bqkv, w1, b1, heads=H)
    assert out.shape == (B, N, D)
    # Exact reciprocal + f32 accumulation: only reassociation-level differences remain.
    assert jnp.allclose(out, ref, atol=1e-4, rtol=1e-4), "mismatch vs JAX reference"
    print("KERNEL_OK")
</pallas_src>

<mosaic_0001>
module attributes {stable_mosaic.version = 11 : i64} {
  func.func @attention_kernel(%arg0: i32, %arg1: memref<8x32xf32, #tpu.memory_space<vmem>>, %arg2: memref<32x96xf32, #tpu.memory_space<vmem>>, %arg3: memref<1x96xf32, #tpu.memory_space<vmem>>, %arg4: memref<32x32xf32, #tpu.memory_space<vmem>>, %arg5: memref<1x32xf32, #tpu.memory_space<vmem>>, %arg6: memref<8x32xf32, #tpu.memory_space<vmem>>) attributes {dimension_semantics = [#tpu.dimension_semantics<parallel>], iteration_bounds = array<i64: 2>, scalar_prefetch = 0 : i64, scratch_operands = 0 : i64, tpu.core_type = #tpu.core_type<tc>, window_params = [{transform_indices = @transform_0, window_bounds = array<i64: 8, 32>}, {pipeline_mode = #tpu.pipeline_mode<synchronous>, transform_indices = @transform_1, window_bounds = array<i64: 32, 96>}, {pipeline_mode = #tpu.pipeline_mode<synchronous>, transform_indices = @transform_2, window_bounds = array<i64: 1, 96>}, {pipeline_mode = #tpu.pipeline_mode<synchronous>, transform_indices = @transform_3, window_bounds = array<i64: 32, 32>}, {pipeline_mode = #tpu.pipeline_mode<synchronous>, transform_indices = @transform_4, window_bounds = array<i64: 1, 32>}, {transform_indices = @transform_5, window_bounds = array<i64: 8, 32>}]} {
    %c0 = arith.constant 0 : index
    %c0_0 = arith.constant 0 : index
    %0 = vector.load %arg1[%c0, %c0_0] : memref<8x32xf32, #tpu.memory_space<vmem>>, vector<8x32xf32>
    %c0_1 = arith.constant 0 : index
    %c0_2 = arith.constant 0 : index
    %1 = vector.load %arg2[%c0_1, %c0_2] : memref<32x96xf32, #tpu.memory_space<vmem>>, vector<32x96xf32>
    %cst = arith.constant dense<0.000000e+00> : vector<8x96xf32>
    %2 = tpu.matmul %0, %1, %cst {dimension_numbers = #tpu.dot_dimension_numbers<[1], [0], [0], [1], [0, 0, 1, 1], [], []>} : vector<8x32xf32>, vector<32x96xf32>, vector<8x96xf32> -> vector<8x96xf32>
    %c0_3 = arith.constant 0 : index
    %c0_4 = arith.constant 0 : index
    %3 = vector.load %arg3[%c0_3, %c0_4] : memref<1x96xf32, #tpu.memory_space<vmem>>, vector<1x96xf32>
    %4 = vector.broadcast %3 : vector<1x96xf32> to vector<8x96xf32>
    %5 = arith.addf %2, %4 : vector<8x96xf32>
    %6 = vector.extract_strided_slice %5 {offsets = [0, 0], sizes = [8, 32], strides = [1, 1]} : vector<8x96xf32> to vector<8x32xf32>
    %cst_5 = arith.constant 0.176776692 : f32
    %7 = vector.broadcast %cst_5 : f32 to vector<8x32xf32>
    %8 = arith.mulf %6, %7 : vector<8x32xf32>
    %9 = vector.extract_strided_slice %5 {offsets = [0, 32], sizes = [8, 32], strides = [1, 1]} : vector<8x96xf32> to vector<8x32xf32>
    %10 = vector.extract_strided_slice %5 {offsets = [0, 64], sizes = [8, 32], strides = [1, 1]} : vector<8x96xf32> to vector<8x32xf32>
    %11 = vector.extract_strided_slice %8 {offsets = [0, 0], sizes = [8, 4], strides = [1, 1]} : vector<8x32xf32> to vector<8x4xf32>
    %12 = vector.extract_strided_slice %8 {offsets = [0, 4], sizes = [8, 4], strides = [1, 1]} : vector<8x32xf32> to vector<8x4xf32>
    %13 = vector.extract_strided_slice %8 {offsets = [0, 8], sizes = [8, 4], strides = [1, 1]} : vector<8x32xf32> to vector<8x4xf32>
    %14 = vector.extract_strided_slice %8 {offsets = [0, 12], sizes = [8, 4], strides = [1, 1]} : vector<8x32xf32> to vector<8x4xf32>
    %15 = vector.extract_strided_slice %8 {offsets = [0, 16], sizes = [8, 4], strides = [1, 1]} : vector<8x32xf32> to vector<8x4xf32>
    %16 = vector.extract_strided_slice %8 {offsets = [0, 20], sizes = [8, 4], strides = [1, 1]} : vector<8x32xf32> to vector<8x4xf32>
    %17 = vector.extract_strided_slice %8 {offsets = [0, 24], sizes = [8, 4], strides = [1, 1]} : vector<8x32xf32> to vector<8x4xf32>
    %18 = vector.extract_strided_slice %8 {offsets = [0, 28], sizes = [8, 4], strides = [1, 1]} : vector<8x32xf32> to vector<8x4xf32>
    %19 = vector.shape_cast %11 : vector<8x4xf32> to vector<1x8x4xf32>
    %20 = vector.shape_cast %12 : vector<8x4xf32> to vector<1x8x4xf32>
    %21 = vector.shape_cast %13 : vector<8x4xf32> to vector<1x8x4xf32>
    %22 = vector.shape_cast %14 : vector<8x4xf32> to vector<1x8x4xf32>
    %23 = vector.shape_cast %15 : vector<8x4xf32> to vector<1x8x4xf32>
    %24 = vector.shape_cast %16 : vector<8x4xf32> to vector<1x8x4xf32>
    %25 = vector.shape_cast %17 : vector<8x4xf32> to vector<1x8x4xf32>
    %26 = vector.shape_cast %18 : vector<8x4xf32> to vector<1x8x4xf32>
    %27 = tpu.concatenate %19, %20, %21, %22, %23, %24, %25, %26 in 0 : vector<1x8x4xf32>, vector<1x8x4xf32>, vector<1x8x4xf32>, vector<1x8x4xf32>, vector<1x8x4xf32>, vector<1x8x4xf32>, vector<1x8x4xf32>, vector<1x8x4xf32> -> vector<8x8x4xf32>
    %28 = vector.extract_strided_slice %9 {offsets = [0, 0], sizes = [8, 4], strides = [1, 1]} : vector<8x32xf32> to vector<8x4xf32>
    %29 = vector.extract_strided_slice %9 {offsets = [0, 4], sizes = [8, 4], strides = [1, 1]} : vector<8x32xf32> to vector<8x4xf32>
    %30 = vector.extract_strided_slice %9 {offsets = [0, 8], sizes = [8, 4], strides = [1, 1]} : vector<8x32xf32> to vector<8x4xf32>
    %31 = vector.extract_strided_slice %9 {offsets = [0, 12], sizes = [8, 4], strides = [1, 1]} : vector<8x32xf32> to vector<8x4xf32>
    %32 = vector.extract_strided_slice %9 {offsets = [0, 16], sizes = [8, 4], strides = [1, 1]} : vector<8x32xf32> to vector<8x4xf32>
    %33 = vector.extract_strided_slice %9 {offsets = [0, 20], sizes = [8, 4], strides = [1, 1]} : vector<8x32xf32> to vector<8x4xf32>
    %34 = vector.extract_strided_slice %9 {offsets = [0, 24], sizes = [8, 4], strides = [1, 1]} : vector<8x32xf32> to vector<8x4xf32>
    %35 = vector.extract_strided_slice %9 {offsets = [0, 28], sizes = [8, 4], strides = [1, 1]} : vector<8x32xf32> to vector<8x4xf32>
    %36 = vector.shape_cast %28 : vector<8x4xf32> to vector<1x8x4xf32>
    %37 = vector.shape_cast %29 : vector<8x4xf32> to vector<1x8x4xf32>
    %38 = vector.shape_cast %30 : vector<8x4xf32> to vector<1x8x4xf32>
    %39 = vector.shape_cast %31 : vector<8x4xf32> to vector<1x8x4xf32>
    %40 = vector.shape_cast %32 : vector<8x4xf32> to vector<1x8x4xf32>
    %41 = vector.shape_cast %33 : vector<8x4xf32> to vector<1x8x4xf32>
    %42 = vector.shape_cast %34 : vector<8x4xf32> to vector<1x8x4xf32>
    %43 = vector.shape_cast %35 : vector<8x4xf32> to vector<1x8x4xf32>
    %44 = tpu.concatenate %36, %37, %38, %39, %40, %41, %42, %43 in 0 : vector<1x8x4xf32>, vector<1x8x4xf32>, vector<1x8x4xf32>, vector<1x8x4xf32>, vector<1x8x4xf32>, vector<1x8x4xf32>, vector<1x8x4xf32>, vector<1x8x4xf32> -> vector<8x8x4xf32>
    %45 = vector.extract_strided_slice %10 {offsets = [0, 0], sizes = [8, 4], strides = [1, 1]} : vector<8x32xf32> to vector<8x4xf32>
    %46 = vector.extract_strided_slice %10 {offsets = [0, 4], sizes = [8, 4], strides = [1, 1]} : vector<8x32xf32> to vector<8x4xf32>
    %47 = vector.extract_strided_slice %10 {offsets = [0, 8], sizes = [8, 4], strides = [1, 1]} : vector<8x32xf32> to vector<8x4xf32>
    %48 = vector.extract_strided_slice %10 {offsets = [0, 12], sizes = [8, 4], strides = [1, 1]} : vector<8x32xf32> to vector<8x4xf32>
    %49 = vector.extract_strided_slice %10 {offsets = [0, 16], sizes = [8, 4], strides = [1, 1]} : vector<8x32xf32> to vector<8x4xf32>
    %50 = vector.extract_strided_slice %10 {offsets = [0, 20], sizes = [8, 4], strides = [1, 1]} : vector<8x32xf32> to vector<8x4xf32>
    %51 = vector.extract_strided_slice %10 {offsets = [0, 24], sizes = [8, 4], strides = [1, 1]} : vector<8x32xf32> to vector<8x4xf32>
    %52 = vector.extract_strided_slice %10 {offsets = [0, 28], sizes = [8, 4], strides = [1, 1]} : vector<8x32xf32> to vector<8x4xf32>
    %53 = vector.shape_cast %45 : vector<8x4xf32> to vector<1x8x4xf32>
    %54 = vector.shape_cast %46 : vector<8x4xf32> to vector<1x8x4xf32>
    %55 = vector.shape_cast %47 : vector<8x4xf32> to vector<1x8x4xf32>
    %56 = vector.shape_cast %48 : vector<8x4xf32> to vector<1x8x4xf32>
    %57 = vector.shape_cast %49 : vector<8x4xf32> to vector<1x8x4xf32>
    %58 = vector.shape_cast %50 : vector<8x4xf32> to vector<1x8x4xf32>
    %59 = vector.shape_cast %51 : vector<8x4xf32> to vector<1x8x4xf32>
    %60 = vector.shape_cast %52 : vector<8x4xf32> to vector<1x8x4xf32>
    %61 = tpu.concatenate %53, %54, %55, %56, %57, %58, %59, %60 in 0 : vector<1x8x4xf32>, vector<1x8x4xf32>, vector<1x8x4xf32>, vector<1x8x4xf32>, vector<1x8x4xf32>, vector<1x8x4xf32>, vector<1x8x4xf32>, vector<1x8x4xf32> -> vector<8x8x4xf32>
    "tpu.trace_start"() <{level = 10 : i32, message = "gnd,gmd->gnm"}> : () -> ()
    %cst_6 = arith.constant dense<0.000000e+00> : vector<8x8x8xf32>
    %62 = tpu.matmul %27, %44, %cst_6 {dimension_numbers = #tpu.dot_dimension_numbers<[2], [2], [1], [1], [0, 0, 0, 1, 1, 1], [0], [0]>} : vector<8x8x4xf32>, vector<8x8x4xf32>, vector<8x8x8xf32> -> vector<8x8x8xf32>
    "tpu.trace_stop"() : () -> ()
    %cst_7 = arith.constant dense<0xFF800000> : vector<8x8xf32>
    %63 = vector.multi_reduction <maximumf>, %62, %cst_7 [2] : vector<8x8x8xf32> to vector<8x8xf32>
    %64 = vector.shape_cast %63 : vector<8x8xf32> to vector<8x8x1xf32>
    %65 = vector.broadcast %64 : vector<8x8x1xf32> to vector<8x8x8xf32>
    %66 = arith.subf %62, %65 : vector<8x8x8xf32>
    %67 = math.exp %66 : vector<8x8x8xf32>
    %cst_8 = arith.constant dense<0.000000e+00> : vector<8x8xf32>
    %68 = vector.multi_reduction <add>, %67, %cst_8 [2] : vector<8x8x8xf32> to vector<8x8xf32>
    %69 = vector.shape_cast %68 : vector<8x8xf32> to vector<8x8x1xf32>
    "tpu.trace_start"() <{level = 10 : i32, message = "gnm,gmd->gnd"}> : () -> ()
    %cst_9 = arith.constant dense<0.000000e+00> : vector<8x8x4xf32>
    %70 = tpu.matmul %67, %61, %cst_9 {dimension_numbers = #tpu.dot_dimension_numbers<[2], [1], [1], [2], [0, 0, 0, 1, 1, 2], [0], [0]>} : vector<8x8x8xf32>, vector<8x8x4xf32>, vector<8x8x4xf32> -> vector<8x8x4xf32>
    "tpu.trace_stop"() : () -> ()
    %71 = tpu.reciprocal %69 : vector<8x8x1xf32> -> vector<8x8x1xf32>
    %72 = vector.broadcast %71 : vector<8x8x1xf32> to vector<8x8x4xf32>
    %73 = arith.mulf %70, %72 : vector<8x8x4xf32>
    %74 = vector.extract_strided_slice %73 {offsets = [0, 0, 0], sizes = [1, 8, 4], strides = [1, 1, 1]} : vector<8x8x4xf32> to vector<1x8x4xf32>
    %75 = vector.shape_cast %74 : vector<1x8x4xf32> to vector<8x4xf32>
    %76 = vector.extract_strided_slice %73 {offsets = [1, 0, 0], sizes = [1, 8, 4], strides = [1, 1, 1]} : vector<8x8x4xf32> to vector<1x8x4xf32>
    %77 = vector.shape_cast %76 : vector<1x8x4xf32> to vector<8x4xf32>
    %78 = vector.extract_strided_slice %73 {offsets = [2, 0, 0], sizes = [1, 8, 4], strides = [1, 1, 1]} : vector<8x8x4xf32> to vector<1x8x4xf32>
    %79 = vector.shape_cast %78 : vector<1x8x4xf32> to vector<8x4xf32>
    %80 = vector.extract_strided_slice %73 {offsets = [3, 0, 0], sizes = [1, 8, 4], strides = [1, 1, 1]} : vector<8x8x4xf32> to vector<1x8x4xf32>
    %81 = vector.shape_cast %80 : vector<1x8x4xf32> to vector<8x4xf32>
    %82 = vector.extract_strided_slice %73 {offsets = [4, 0, 0], sizes = [1, 8, 4], strides = [1, 1, 1]} : vector<8x8x4xf32> to vector<1x8x4xf32>
    %83 = vector.shape_cast %82 : vector<1x8x4xf32> to vector<8x4xf32>
    %84 = vector.extract_strided_slice %73 {offsets = [5, 0, 0], sizes = [1, 8, 4], strides = [1, 1, 1]} : vector<8x8x4xf32> to vector<1x8x4xf32>
    %85 = vector.shape_cast %84 : vector<1x8x4xf32> to vector<8x4xf32>
    %86 = vector.extract_strided_slice %73 {offsets = [6, 0, 0], sizes = [1, 8, 4], strides = [1, 1, 1]} : vector<8x8x4xf32> to vector<1x8x4xf32>
    %87 = vector.shape_cast %86 : vector<1x8x4xf32> to vector<8x4xf32>
    %88 = vector.extract_strided_slice %73 {offsets = [7, 0, 0], sizes = [1, 8, 4], strides = [1, 1, 1]} : vector<8x8x4xf32> to vector<1x8x4xf32>
    %89 = vector.shape_cast %88 : vector<1x8x4xf32> to vector<8x4xf32>
    %90 = tpu.concatenate %75, %77, %79, %81, %83, %85, %87, %89 in 1 : vector<8x4xf32>, vector<8x4xf32>, vector<8x4xf32>, vector<8x4xf32>, vector<8x4xf32>, vector<8x4xf32>, vector<8x4xf32>, vector<8x4xf32> -> vector<8x32xf32>
    %c0_10 = arith.constant 0 : index
    %c0_11 = arith.constant 0 : index
    %91 = vector.load %arg4[%c0_10, %c0_11] : memref<32x32xf32, #tpu.memory_space<vmem>>, vector<32x32xf32>
    %cst_12 = arith.constant dense<0.000000e+00> : vector<8x32xf32>
    %92 = tpu.matmul %90, %91, %cst_12 {dimension_numbers = #tpu.dot_dimension_numbers<[1], [0], [0], [1], [0, 0, 1, 1], [], []>} : vector<8x32xf32>, vector<32x32xf32>, vector<8x32xf32> -> vector<8x32xf32>
    %c0_13 = arith.constant 0 : index
    %c0_14 = arith.constant 0 : index
    %93 = vector.load %arg5[%c0_13, %c0_14] : memref<1x32xf32, #tpu.memory_space<vmem>>, vector<1x32xf32>
    %94 = vector.broadcast %93 : vector<1x32xf32> to vector<8x32xf32>
    %95 = arith.addf %92, %94 : vector<8x32xf32>
    %c0_15 = arith.constant 0 : index
    %c0_16 = arith.constant 0 : index
    %96 = vector.load %arg6[%c0_15, %c0_16] : memref<8x32xf32, #tpu.memory_space<vmem>>, vector<8x32xf32>
    tpu.vector_store %arg6[%c0_15, %c0_16], %95 {strides = array<i32>} : memref<8x32xf32, #tpu.memory_space<vmem>>, vector<8x32xf32>,
    return
  }
  func.func @transform_0(%arg0: i32) -> (i32, i32) {
    %c0_i32 = arith.constant 0 : i32
    %c0_i32_0 = arith.constant 0 : i32
    return %arg0, %c0_i32 : i32, i32
  }
  func.func @transform_1(%arg0: i32) -> (i32, i32) {
    %c0_i32 = arith.constant 0 : i32
    %c0_i32_0 = arith.constant 0 : i32
    %c0_i32_1 = arith.constant 0 : i32
    return %c0_i32, %c0_i32_0 : i32, i32
  }
  func.func @transform_2(%arg0: i32) -> (i32, i32) {
    %c0_i32 = arith.constant 0 : i32
    %c0_i32_0 = arith.constant 0 : i32
    %c0_i32_1 = arith.constant 0 : i32
    return %c0_i32, %c0_i32_0 : i32, i32
  }
  func.func @transform_3(%arg0: i32) -> (i32, i32) {
    %c0_i32 = arith.constant 0 : i32
    %c0_i32_0 = arith.constant 0 : i32
    %c0_i32_1 = arith.constant 0 : i32
    return %c0_i32, %c0_i32_0 : i32, i32
  }
  func.func @transform_4(%arg0: i32) -> (i32, i32) {
    %c0_i32 = arith.constant 0 : i32
    %c0_i32_0 = arith.constant 0 : i32
    %c0_i32_1 = arith.constant 0 : i32
    return %c0_i32, %c0_i32_0 : i32, i32
  }
  func.func @transform_5(%arg0: i32) -> (i32, i32) {
    %c0_i32 = arith.constant 0 : i32
    %c0_i32_0 = arith.constant 0 : i32
    return %arg0, %c0_i32 : i32, i32
  }
}

</mosaic_0001>

<llo_original>
// kernel: tpu_custom_call.1
$region0: #{tpu_custom_call.1}
  #allocation0 [shape = 'u32[]', space=smem, size = 0x4, offset = 0x4, fixed_abs, tag = 'smem constant byte address 0x4 - core index']
  #allocation1 [shape = 'u32[144,128]{1,0:T(1,128)}', space=vmem, size = 0x12000, scoped, tag = 'internal scratch']
  %s0 = inlined_call_operand.hbm [shape: f32[16,32], index: 0, kind: input, shape index: {}]
  %s1 = inlined_call_operand.hbm [shape: f32[32,96], index: 1, kind: input, shape index: {}]
  %s2 = inlined_call_operand.vmem [shape: f32[1,96], index: 2, kind: input, shape index: {}]
  %s3 = inlined_call_operand.hbm [shape: f32[32,32], index: 3, kind: input, shape index: {}]
  %s4 = inlined_call_operand.vmem [shape: f32[1,32], index: 4, kind: input, shape index: {}]
  %s5 = inlined_call_operand.hbm [shape: f32[16,32], index: 5, kind: output, shape index: {}]
  %s6 = sld [smem:[#allocation0]]
  $region65: #{tpu_custom_call.1} parent=0
    _
  %s8 = ssub.s32 1, %s6
  %s9 = scalar_select 0, %s8, %s6
  $region1: #{tpu_custom_call.1} parent=0
    #allocation2 [shape = 'u8[8192]{0}', space=vmem, size = 0x2000, scoped, tag = 'input window, operand 0']
    #allocation3 [shape = 's32[2]{0}', space=sflag, size = 0x8, scoped, tag = 'scoped memory for tpu_custom_call.1']
    #allocation4 [shape = 's32[2]{0}', space=sflag, size = 0x8, scoped, tag = 'scoped memory for tpu_custom_call.1']
    #allocation5 [shape = 'u8[16384]{0}', space=vmem, size = 0x4000, scoped, tag = 'input window, operand 1, single buffered']
    #allocation6 [shape = 's32[1]{0}', space=sflag, size = 0x4, scoped, tag = 'scoped memory for tpu_custom_call.1']
    #allocation7 [shape = 'u8[16384]{0}', space=vmem, size = 0x4000, scoped, tag = 'input window, operand 3, single buffered']
    #allocation8 [shape = 'u8[8192]{0}', space=vmem, size = 0x2000, scoped, tag = 'output window, operand 0']
    %10 = vsyncpa [#allocation3], 0
    %s11 = scalar_lea.sflag [#allocation3], 1
    %12 = vsyncpa %s11, 0
    %13 = vsyncpa [#allocation6], 0
    %14 = vsyncpa [#allocation4], 0
    %s15 = scalar_lea.sflag [#allocation4], 1
    %16 = vsyncpa %s15, 0
    loop: start=0, step=1, limit=4
    $region2: #{tpu_custom_call.1} parent=1 // loop_pre_header
      _
    $region3: #{tpu_custom_call.1} parent=1 // loop_header
      %s18 = sphi 0, %s22
      %p19 = scmp.ge.s32.totalorder %s18, 4
      %s28 = sphi 0, %s30
      %s31 = sphi 0, %s28
      %s32 = sphi 0, %s31
      %s48 = sphi 0, %s32
      %s52 = sphi 0, %s52
      %s54 = sphi 0, %s52
      %s55 = sphi 0, %s54
      %s69 = sphi 0, %s55
      %s73 = sphi 0, %s73
      %s75 = sphi 0, %s73
      %s76 = sphi 0, %s75
      %s90 = sphi 0, %s76
      %s94 = sphi 0, %s94
      %s96 = sphi 0, %s94
      %s97 = sphi 0, %s96
      %s111 = sphi 0, %s97
      %s115 = sphi 0, %s115
      %s117 = sphi 0, %s115
      %s118 = sphi 0, %s117
      %s132 = sphi 0, %s118
      %s138 = sphi 0, %s140
      %s141 = sphi 0, %s138
      %s142 = sphi 0, %s141
      %s158 = sphi 0, %s142
    $region4: #{tpu_custom_call.1} parent=1 // loop_header_branch
      %21 = sbr.rel (%p19) target = $region8
    $region5: #{tpu_custom_call.1} parent=1 // loop_body
      %s23 = ssub.s32 %s18, 1
      %s24 = ssub.s32 %s18, 2
      %s25 = sadd.s32 %s18, 1
      %s26 = ssub.s32 %s18, %s25
      %p27 = scmp.eq.s32.totalorder %s26, 0
      %s29 = sadd.s32 %s28, 1
      %s30 = scalar_select %p27, %s28, %s29
      %p33 = pneg %p27
      %p34 = scmp.eq.s32.totalorder %s18, 1
      %p35 = por %p33, %p34
      %p36 = scmp.ne.s32.totalorder %s28, %s31
      %p37 = scmp.eq.s32.totalorder %s18, 0
      %p38 = por %p36, %p37
      %p39 = scmp.ne.s32.totalorder %s28, %s31
      %p40 = scmp.eq.s32.totalorder %s23, 1
      %p41 = por %p39, %p40
      %p42 = scmp.ne.s32.totalorder %s31, %s32
      %p43 = scmp.eq.s32.totalorder %s23, 0
      %p44 = por %p42, %p43
      %p45 = scmp.ne.s32.totalorder %s31, %s32
      %p46 = scmp.eq.s32.totalorder %s24, 1
      %p47 = por %p45, %p46
      %p49 = scmp.ne.s32.totalorder %s32, %s48
      %p50 = scmp.eq.s32.totalorder %s24, 0
      %p51 = por %p49, %p50
      %s53 = sadd.s32 %s52, 1
      %p56 = scmp.eq.s32.totalorder %s18, 1
      %p57 = scmp.ne.s32.totalorder %s52, %s54
      %p58 = scmp.eq.s32.totalorder %s18, 0
      %p59 = por %p57, %p58
      %p60 = scmp.ne.s32.totalorder %s52, %s54
      %p61 = scmp.eq.s32.totalorder %s23, 1
      %p62 = por %p60, %p61
      %p63 = scmp.ne.s32.totalorder %s54, %s55
      %p64 = scmp.eq.s32.totalorder %s23, 0
      %p65 = por %p63, %p64
      %p66 = scmp.ne.s32.totalorder %s54, %s55
      %p67 = scmp.eq.s32.totalorder %s24, 1
      %p68 = por %p66, %p67
      %p70 = scmp.ne.s32.totalorder %s55, %s69
      %p71 = scmp.eq.s32.totalorder %s24, 0
      %p72 = por %p70, %p71
      %s74 = sadd.s32 %s73, 1
      %p77 = scmp.eq.s32.totalorder %s18, 1
      %p78 = scmp.ne.s32.totalorder %s73, %s75
      %p79 = scmp.eq.s32.totalorder %s18, 0
      %p80 = por %p78, %p79
      %p81 = scmp.ne.s32.totalorder %s73, %s75
      %p82 = scmp.eq.s32.totalorder %s23, 1
      %p83 = por %p81, %p82
      %p84 = scmp.ne.s32.totalorder %s75, %s76
      %p85 = scmp.eq.s32.totalorder %s23, 0
      %p86 = por %p84, %p85
      %p87 = scmp.ne.s32.totalorder %s75, %s76
      %p88 = scmp.eq.s32.totalorder %s24, 1
      %p89 = por %p87, %p88
      %p91 = scmp.ne.s32.totalorder %s76, %s90
      %p92 = scmp.eq.s32.totalorder %s24, 0
      %p93 = por %p91, %p92
      %s95 = sadd.s32 %s94, 1
      %p98 = scmp.eq.s32.totalorder %s18, 1
      %p99 = scmp.ne.s32.totalorder %s94, %s96
      %p100 = scmp.eq.s32.totalorder %s18, 0
      %p101 = por %p99, %p100
      %p102 = scmp.ne.s32.totalorder %s94, %s96
      %p103 = scmp.eq.s32.totalorder %s23, 1
      %p104 = por %p102, %p103
      %p105 = scmp.ne.s32.totalorder %s96, %s97
      %p106 = scmp.eq.s32.totalorder %s23, 0
      %p107 = por %p105, %p106
      %p108 = scmp.ne.s32.totalorder %s96, %s97
      %p109 = scmp.eq.s32.totalorder %s24, 1
      %p110 = por %p108, %p109
      %p112 = scmp.ne.s32.totalorder %s97, %s111
      %p113 = scmp.eq.s32.totalorder %s24, 0
      %p114 = por %p112, %p113
      %s116 = sadd.s32 %s115, 1
      %p119 = scmp.eq.s32.totalorder %s18, 1
      %p120 = scmp.ne.s32.totalorder %s115, %s117
      %p121 = scmp.eq.s32.totalorder %s18, 0
      %p122 = por %p120, %p121
      %p123 = scmp.ne.s32.totalorder %s115, %s117
      %p124 = scmp.eq.s32.totalorder %s23, 1
      %p125 = por %p123, %p124
      %p126 = scmp.ne.s32.totalorder %s117, %s118
      %p127 = scmp.eq.s32.totalorder %s23, 0
      %p128 = por %p126, %p127
      %p129 = scmp.ne.s32.totalorder %s117, %s118
      %p130 = scmp.eq.s32.totalorder %s24, 1
      %p131 = por %p129, %p130
      %p133 = scmp.ne.s32.totalorder %s118, %s132
      %p134 = scmp.eq.s32.totalorder %s24, 0
      %p135 = por %p133, %p134
      %s136 = ssub.s32 %s18, %s25
      %p137 = scmp.eq.s32.totalorder %s136, 0
      %s139 = sadd.s32 %s138, 1
      %s140 = scalar_select %p137, %s138, %s139
      %p143 = pneg %p137
      %p144 = scmp.eq.s32.totalorder %s18, 1
      %p145 = por %p143, %p144
      %p146 = scmp.ne.s32.totalorder %s138, %s141
      %p147 = scmp.eq.s32.totalorder %s18, 0
      %p148 = por %p146, %p147
      %p149 = scmp.ne.s32.totalorder %s138, %s141
      %p150 = scmp.eq.s32.totalorder %s23, 1
      %p151 = por %p149, %p150
      %p152 = scmp.ne.s32.totalorder %s141, %s142
      %p153 = scmp.eq.s32.totalorder %s23, 0
      %p154 = por %p152, %p153
      %p155 = scmp.ne.s32.totalorder %s141, %s142
      %p156 = scmp.eq.s32.totalorder %s24, 1
      %p157 = por %p155, %p156
      %p159 = scmp.ne.s32.totalorder %s142, %s158
      %p160 = scmp.eq.s32.totalorder %s24, 0
      %p161 = por %p159, %p160
      %p162 = scmp.le.s32.totalorder 1, %s18
      %p163 = scmp.lt.s32.totalorder %s18, 3
      %p164 = pnand %p162, %p163
      %p165 = pneg %p164
      // Predicated region
      $region9: #{tpu_custom_call.1} parent=5 // pred_check
        _
      $region10: #{tpu_custom_call.1} parent=5 // pred_check_branch
        %167 = sbr.rel (%p164) target = $region12
      $region11: #{tpu_custom_call.1} parent=5 // pred_region
        %s168 = ssub.s32 %s18, 1
        // Predicated region
        $region13: #{tpu_custom_call.1} parent=11 // pred_check
          %p169 = pneg %p65
        $region14: #{tpu_custom_call.1} parent=11 // pred_check_branch
          %171 = sbr.rel (%p169) target = $region16
        $region15: #{tpu_custom_call.1} parent=11 // pred_region
          %s173 = ssub.s32 512, 512
          %174 = vsyncadd [#allocation6], %s173
          %s175 = sshll.u32 [#allocation5], 4
          %s176 = int_to_ptr.vmem [resolvable:$true] %s175
          %181 = dma.hbm_to_vmem [thread:$0]  %s1, 512, %s176, [#allocation6], 128, 128, 8
        $region16: #{tpu_custom_call.1} parent=11 // pred_fallthru
          _
        // Predicated region
        $region17: #{tpu_custom_call.1} parent=11 // pred_check
          %p182 = pneg %p86
        $region18: #{tpu_custom_call.1} parent=11 // pred_check_branch
          %184 = sbr.rel (%p182) target = $region20
        $region19: #{tpu_custom_call.1} parent=11 // pred_region
          _
        $region20: #{tpu_custom_call.1} parent=11 // pred_fallthru
          _
        // Predicated region
        $region21: #{tpu_custom_call.1} parent=11 // pred_check
          %p185 = pneg %p107
        $region22: #{tpu_custom_call.1} parent=11 // pred_check_branch
          %187 = sbr.rel (%p185) target = $region24
        $region23: #{tpu_custom_call.1} parent=11 // pred_region
          %s189 = ssub.s32 512, 512
          %190 = vsyncadd [#allocation6], %s189
          %s191 = sshll.u32 [#allocation7], 4
          %s192 = int_to_ptr.vmem [resolvable:$true] %s191
          %197 = dma.hbm_to_vmem [thread:$0]  %s3, 512, %s192, [#allocation6], 128, 128, 8
        $region24: #{tpu_custom_call.1} parent=11 // pred_fallthru
          _
        // Predicated region
        $region25: #{tpu_custom_call.1} parent=11 // pred_check
          %p198 = pneg %p128
        $region26: #{tpu_custom_call.1} parent=11 // pred_check_branch
          %200 = sbr.rel (%p198) target = $region28
        $region27: #{tpu_custom_call.1} parent=11 // pred_region
          _
        $region28: #{tpu_custom_call.1} parent=11 // pred_fallthru
          _
      $region12: #{tpu_custom_call.1} parent=5 // pred_fallthru
        _
      %p201 = scmp.lt.s32.totalorder %s18, 2
      // Predicated region
      $region29: #{tpu_custom_call.1} parent=5 // pred_check
        %p202 = pneg %p201
      $region30: #{tpu_custom_call.1} parent=5 // pred_check_branch
        %204 = sbr.rel (%p202) target = $region32
      $region31: #{tpu_custom_call.1} parent=5 // pred_region
        // Predicated region
        $region33: #{tpu_custom_call.1} parent=31 // pred_check
          %p205 = pneg %p38
        $region34: #{tpu_custom_call.1} parent=31 // pred_check_branch
          %207 = sbr.rel (%p205) target = $region36
        $region35: #{tpu_custom_call.1} parent=31 // pred_region
          %s208 = sand.u32 %s28, 1
          %s209 = scalar_lea.sflag [#allocation3], %s208
          %s210 = sand.u32 %s28, 1
          %s211 = smul.addr %s210, 8
          %s212 = scalar_lea.vmem [#allocation2], %s211
          %s214 = ssub.s32 128, 128
          %215 = vsyncadd %s209, %s214
          %s216 = smul.addr %s18, 128
          %s217 = scalar_lea.hbm %s0, %s216
          %s219 = sshll.u32 %s212, 4
          %s220 = int_to_ptr.vmem [resolvable:$true] %s219
          %222 = dma.hbm_to_vmem [thread:$0]  %s217, 128, %s220, %s209
        $region36: #{tpu_custom_call.1} parent=31 // pred_fallthru
          _
      $region32: #{tpu_custom_call.1} parent=5 // pred_fallthru
        _
      %p223 = scmp.le.s32.totalorder 1, %s18
      %p224 = scmp.lt.s32.totalorder %s18, 3
      %p225 = pnand %p223, %p224
      %p226 = pneg %p225
      // Predicated region
      $region37: #{tpu_custom_call.1} parent=5 // pred_check
        _
      $region38: #{tpu_custom_call.1} parent=5 // pred_check_branch
        %228 = sbr.rel (%p225) target = $region40
      $region39: #{tpu_custom_call.1} parent=5 // pred_region
        %s229 = ssub.s32 %s18, 1
        %s230 = sand.u32 %s31, 1
        %s231 = scalar_lea.sflag [#allocation3], %s230
        %s232 = sand.u32 %s31, 1
        %s233 = smul.addr %s232, 8
        %s234 = scalar_lea.vmem [#allocation2], %s233
        // Predicated region
        $region41: #{tpu_custom_call.1} parent=39 // pred_check
          %p235 = pneg %p44
        $region42: #{tpu_custom_call.1} parent=39 // pred_check_branch
          %237 = sbr.rel (%p235) target = $region44
        $region43: #{tpu_custom_call.1} parent=39 // pred_region
          %238 = dma.done %s231, 128
        $region44: #{tpu_custom_call.1} parent=39 // pred_fallthru
          _
        // Predicated region
        $region45: #{tpu_custom_call.1} parent=39 // pred_check
          %p239 = pneg %p65
        $region46: #{tpu_custom_call.1} parent=39 // pred_check_branch
          %241 = sbr.rel (%p239) target = $region48
        $region47: #{tpu_custom_call.1} parent=39 // pred_region
          %242 = dma.done [#allocation6], 512
        $region48: #{tpu_custom_call.1} parent=39 // pred_fallthru
          _
        // Predicated region
        $region49: #{tpu_custom_call.1} parent=39 // pred_check
          %p243 = pneg %p107
        $region50: #{tpu_custom_call.1} parent=39 // pred_check_branch
          %245 = sbr.rel (%p243) target = $region52
        $region51: #{tpu_custom_call.1} parent=39 // pred_region
          %246 = dma.done [#allocation6], 512
        $region52: #{tpu_custom_call.1} parent=39 // pred_fallthru
          _
        %s247 = sand.u32 %s31, 1
        %s248 = scalar_lea.sflag [#allocation3], %s247
        %s249 = sand.u32 %s31, 1
        %s250 = smul.addr %s249, 8
        %s251 = scalar_lea.vmem [#allocation2], %s250
        %p252 = pneg %p44
        %p253 = pneg %p41
        %p254 = pneg %p65
        %p255 = pneg %p62
        %p256 = pneg %p86
        %p257 = pneg %p83
        %p258 = pneg %p107
        %p259 = pneg %p104
        %p260 = pneg %p128
        %p261 = pneg %p125
        %p262 = pneg %p154
        %p263 = pneg %p151
        %s264 = sand.u32 %s141, 1
        %s265 = scalar_lea.sflag [#allocation4], %s264
        %s266 = sand.u32 %s141, 1
        %s267 = smul.addr %s266, 8
        %s268 = scalar_lea.vmem [#allocation8], %s267
        %v269 = vld [vmem:[%s234] sm:$0xff]
        %v270 = vld [vmem:[#allocation5] sm:$0xff]
        %v271 = vld [vmem:[#allocation5 + $0x8] sm:$0xff]
        %v272 = vld [vmem:[#allocation5 + $0x10] sm:$0xff]
        %v273 = vld [vmem:[#allocation5 + $0x18] sm:$0xff]
        %v274 = vld [vmem:[%s2] sm:$0x1]
        %v276 = vlaneseq
        %v277 = vshrl.u32 %v276, 7
        %v278 = vsub.s32 0, %v277
        %v279 = vrot.slane %v274, %v278
        %vm281 = vcmask 261120
        %v283 = vsel %vm281, %v269, 0
        %285 = vmatprep.subr.mxu0 0.0
        %286 = vmatpush1.msra.mxu0 0.0
        %287 = vmatprep.subr.mxu0 0.0
        %288 = vmatpush1.msra.mxu0 0.0
        %289 = vmatprep.subr.mxu0 0.0
        %290 = vmatpush1.msra.mxu0 0.0
        %291 = vmatprep.subr.mxu0 0.0
        %292 = vmatpush1.msra.mxu0 0.0
        %293 = vmatprep.subr.mxu0 0.0
        %294 = vmatpush1.msra.mxu0 0.0
        %295 = vmatprep.subr.mxu0 0.0
        %296 = vmatpush1.msra.mxu0 0.0
        %297 = vmatprep.subr.mxu0 0.0
        %298 = vmatpush1.msra.mxu0 0.0
        %299 = vmatprep.subr.mxu0 0.0
        %300 = vmatpush1.msra.mxu0 0.0
        %301 = vmatprep.subr.mxu0 0.0
        %302 = vmatpush1.msra.mxu0 0.0
        %303 = vmatprep.subr.mxu0 0.0
        %304 = vmatpush1.msra.mxu0 0.0
        %305 = vmatprep.subr.mxu0 0.0
        %306 = vmatpush1.msra.mxu0 0.0
        %307 = vmatprep.subr.mxu0 0.0
        %308 = vmatpush1.msra.mxu0 0.0
        %309 = vmatprep.subr.mxu0 0.0
        %310 = vmatpush1.msra.mxu0 %v273
        %311 = vmatprep.subr.mxu0 0.0
        %312 = vmatpush1.msra.mxu0 %v272
        %313 = vmatprep.subr.mxu0 0.0
        %314 = vmatpush1.msra.mxu0 %v271
        %315 = vmatprep.subr.mxu0 0.0
        %316 = vmatpush1.msra.mxu0 %v270
        %317 = vmatprep.subr.mxu0 0.0
        %318 = vmatpush2.msra.mxu0 0.0
        %319 = vmatprep.subr.mxu0 0.0
        %320 = vmatpush2.msra.mxu0 0.0
        %321 = vmatprep.subr.mxu0 0.0
        %322 = vmatpush2.msra.mxu0 0.0
        %323 = vmatprep.subr.mxu0 0.0
        %324 = vmatpush2.msra.mxu0 0.0
        %325 = vmatprep.subr.mxu0 0.0
        %326 = vmatpush2.msra.mxu0 0.0
        %327 = vmatprep.subr.mxu0 0.0
        %328 = vmatpush2.msra.mxu0 0.0
        %329 = vmatprep.subr.mxu0 0.0
        %330 = vmatpush2.msra.mxu0 0.0
        %331 = vmatprep.subr.mxu0 0.0
        %332 = vmatpush2.msra.mxu0 0.0
        %333 = vmatprep.subr.mxu0 0.0
        %334 = vmatpush2.msra.mxu0 0.0
        %335 = vmatprep.subr.mxu0 0.0
        %336 = vmatpush2.msra.mxu0 0.0
        %337 = vmatprep.subr.mxu0 0.0
        %338 = vmatpush2.msra.mxu0 0.0
        %339 = vmatprep.subr.mxu0 0.0
        %340 = vmatpush2.msra.mxu0 0.0
        %341 = vmatprep.subr.mxu0 0.0
        %342 = vmatpush2.msra.mxu0 0.0
        %343 = vmatprep.subr.mxu0 0.0
        %344 = vmatpush2.msra.mxu0 0.0
        %345 = vmatprep.subr.mxu0 0.0
        %346 = vmatpush2.msra.mxu0 0.0
        %347 = vmatprep.subr.mxu0 0.0
        %348 = vmatpush2.msra.mxu0 0.0
        %349 = vmatprep.mubr.f32.mxu0 0.0
        %350 = vmatmul.mubr.f32.gmra.mxu0 %v283
        %v351 = vpop.f32.mrf.mxu0
        %v352 = vadd.f32 %v279, %v351
        %v353 = vpop.f32.mrf.mxu0
        %354 = vdwg.mxu0
        %v355 = vmul.f32 %v352, 0.17677669
        %357 = vrot.lane.b32.xlu0 %v355, 124
        %v358 = vpop.permute.xlu0 %357
        %359 = vrot.lane.b32.xlu0 %v355, 120
        %v360 = vpop.permute.xlu0 %359
        %361 = vrot.lane.b32.xlu0 %v355, 116
        %v362 = vpop.permute.xlu0 %361
        %363 = vrot.lane.b32.xlu0 %v355, 112
        %v364 = vpop.permute.xlu0 %363
        %365 = vrot.lane.b32.xlu0 %v355, 108
        %v366 = vpop.permute.xlu0 %365
        %367 = vrot.lane.b32.xlu0 %v355, 104
        %v368 = vpop.permute.xlu0 %367
        %369 = vrot.lane.b32.xlu0 %v355, 100
        %v370 = vpop.permute.xlu0 %369
        %372 = vrot.lane.b32.xlu0 %v352, 124
        %v373 = vpop.permute.xlu0 %372
        %374 = vrot.lane.b32.xlu0 %v352, 120
        %v375 = vpop.permute.xlu0 %374
        %376 = vrot.lane.b32.xlu0 %v352, 116
        %v377 = vpop.permute.xlu0 %376
        %378 = vrot.lane.b32.xlu0 %v352, 112
        %v379 = vpop.permute.xlu0 %378
        %380 = vrot.lane.b32.xlu0 %v352, 108
        %v381 = vpop.permute.xlu0 %380
        %382 = vrot.lane.b32.xlu0 %v352, 104
        %v383 = vpop.permute.xlu0 %382
        %384 = vrot.lane.b32.xlu0 %v352, 100
        %v385 = vpop.permute.xlu0 %384
        %386 = vrot.lane.b32.xlu0 %v352, 96
        %v387 = vpop.permute.xlu0 %386
        %vm388 = vcmask 31744
        %v389 = vsel %vm388, %v355, 0
        %v391 = vsel %vm388, %v387, 0
        %393 = vmatprep.subr.mxu0 0.0
        %394 = vmatpush1.xpose.msra.mxu0 0.0
        %395 = vmatprep.subr.mxu0 0.0
        %396 = vmatpush1.xpose.msra.mxu0 0.0
        %397 = vmatprep.subr.mxu0 0.0
        %398 = vmatpush1.xpose.msra.mxu0 0.0
        %399 = vmatprep.subr.mxu0 0.0
        %400 = vmatpush1.xpose.msra.mxu0 0.0
        %401 = vmatprep.subr.mxu0 0.0
        %402 = vmatpush1.xpose.msra.mxu0 0.0
        %403 = vmatprep.subr.mxu0 0.0
        %404 = vmatpush1.xpose.msra.mxu0 0.0
        %405 = vmatprep.subr.mxu0 0.0
        %406 = vmatpush1.xpose.msra.mxu0 0.0
        %407 = vmatprep.subr.mxu0 0.0
        %408 = vmatpush1.xpose.msra.mxu0 0.0
        %409 = vmatprep.subr.mxu0 0.0
        %410 = vmatpush1.xpose.msra.mxu0 0.0
        %411 = vmatprep.subr.mxu0 0.0
        %412 = vmatpush1.xpose.msra.mxu0 0.0
        %413 = vmatprep.subr.mxu0 0.0
        %414 = vmatpush1.xpose.msra.mxu0 0.0
        %415 = vmatprep.subr.mxu0 0.0
        %416 = vmatpush1.xpose.msra.mxu0 0.0
        %417 = vmatprep.subr.mxu0 0.0
        %418 = vmatpush1.xpose.msra.mxu0 0.0
        %419 = vmatprep.subr.mxu0 0.0
        %420 = vmatpush1.xpose.msra.mxu0 0.0
        %421 = vmatprep.subr.mxu0 0.0
        %422 = vmatpush1.xpose.msra.mxu0 0.0
        %423 = vmatprep.subr.mxu0 0.0
        %424 = vmatpush1.xpose.msra.mxu0 %v391
        %425 = vmatprep.subr.mxu0 0.0
        %426 = vmatpush2.xpose.msra.mxu0 0.0
        %427 = vmatprep.subr.mxu0 0.0
        %428 = vmatpush2.xpose.msra.mxu0 0.0
        %429 = vmatprep.subr.mxu0 0.0
        %430 = vmatpush2.xpose.msra.mxu0 0.0
        %431 = vmatprep.subr.mxu0 0.0
        %432 = vmatpush2.xpose.msra.mxu0 0.0
        %433 = vmatprep.subr.mxu0 0.0
        %434 = vmatpush2.xpose.msra.mxu0 0.0
        %435 = vmatprep.subr.mxu0 0.0
        %436 = vmatpush2.xpose.msra.mxu0 0.0
        %437 = vmatprep.subr.mxu0 0.0
        %438 = vmatpush2.xpose.msra.mxu0 0.0
        %439 = vmatprep.subr.mxu0 0.0
        %440 = vmatpush2.xpose.msra.mxu0 0.0
        %441 = vmatprep.subr.mxu0 0.0
        %442 = vmatpush2.xpose.msra.mxu0 0.0
        %443 = vmatprep.subr.mxu0 0.0
        %444 = vmatpush2.xpose.msra.mxu0 0.0
        %445 = vmatprep.subr.mxu0 0.0
        %446 = vmatpush2.xpose.msra.mxu0 0.0
        %447 = vmatprep.subr.mxu0 0.0
        %448 = vmatpush2.xpose.msra.mxu0 0.0
        %449 = vmatprep.subr.mxu0 0.0
        %450 = vmatpush2.xpose.msra.mxu0 0.0
        %451 = vmatprep.subr.mxu0 0.0
        %452 = vmatpush2.xpose.msra.mxu0 0.0
        %453 = vmatprep.subr.mxu0 0.0
        %454 = vmatpush2.xpose.msra.mxu0 0.0
        %455 = vmatprep.subr.mxu0 0.0
        %456 = vmatpush2.xpose.msra.mxu0 0.0
        %457 = vmatprep.mubr.f32.mxu0 0.0
        %458 = vmatmul.mubr.f32.gmra.mxu0 %v389
        %v459 = vpop.f32.mrf.mxu0
        %v460 = vadd.f32 0.0, %v459
        %v461 = vpop.f32.mrf.mxu0
        %462 = vdwg.mxu0
        %463 = vrot.lane.b32.xlu0 %v373, 96
        %v464 = vpop.permute.xlu0 %463
        %v465 = vsel %vm388, %v358, 0
        %v467 = vsel %vm388, %v464, 0
        %469 = vmatprep.subr.mxu0 0.0
        %470 = vmatpush1.xpose.msra.mxu0 0.0
        %471 = vmatprep.subr.mxu0 0.0
        %472 = vmatpush1.xpose.msra.mxu0 0.0
        %473 = vmatprep.subr.mxu0 0.0
        %474 = vmatpush1.xpose.msra.mxu0 0.0
        %475 = vmatprep.subr.mxu0 0.0
        %476 = vmatpush1.xpose.msra.mxu0 0.0
        %477 = vmatprep.subr.mxu0 0.0
        %478 = vmatpush1.xpose.msra.mxu0 0.0
        %479 = vmatprep.subr.mxu0 0.0
        %480 = vmatpush1.xpose.msra.mxu0 0.0
        %481 = vmatprep.subr.mxu0 0.0
        %482 = vmatpush1.xpose.msra.mxu0 0.0
        %483 = vmatprep.subr.mxu0 0.0
        %484 = vmatpush1.xpose.msra.mxu0 0.0
        %485 = vmatprep.subr.mxu0 0.0
        %486 = vmatpush1.xpose.msra.mxu0 0.0
        %487 = vmatprep.subr.mxu0 0.0
        %488 = vmatpush1.xpose.msra.mxu0 0.0
        %489 = vmatprep.subr.mxu0 0.0
        %490 = vmatpush1.xpose.msra.mxu0 0.0
        %491 = vmatprep.subr.mxu0 0.0
        %492 = vmatpush1.xpose.msra.mxu0 0.0
        %493 = vmatprep.subr.mxu0 0.0
        %494 = vmatpush1.xpose.msra.mxu0 0.0
        %495 = vmatprep.subr.mxu0 0.0
        %496 = vmatpush1.xpose.msra.mxu0 0.0
        %497 = vmatprep.subr.mxu0 0.0
        %498 = vmatpush1.xpose.msra.mxu0 0.0
        %499 = vmatprep.subr.mxu0 0.0
        %500 = vmatpush1.xpose.msra.mxu0 %v467
        %501 = vmatprep.subr.mxu0 0.0
        %502 = vmatpush2.xpose.msra.mxu0 0.0
        %503 = vmatprep.subr.mxu0 0.0
        %504 = vmatpush2.xpose.msra.mxu0 0.0
        %505 = vmatprep.subr.mxu0 0.0
        %506 = vmatpush2.xpose.msra.mxu0 0.0
        %507 = vmatprep.subr.mxu0 0.0
        %508 = vmatpush2.xpose.msra.mxu0 0.0
        %509 = vmatprep.subr.mxu0 0.0
        %510 = vmatpush2.xpose.msra.mxu0 0.0
        %511 = vmatprep.subr.mxu0 0.0
        %512 = vmatpush2.xpose.msra.mxu0 0.0
        %513 = vmatprep.subr.mxu0 0.0
        %514 = vmatpush2.xpose.msra.mxu0 0.0
        %515 = vmatprep.subr.mxu0 0.0
        %516 = vmatpush2.xpose.msra.mxu0 0.0
        %517 = vmatprep.subr.mxu0 0.0
        %518 = vmatpush2.xpose.msra.mxu0 0.0
        %519 = vmatprep.subr.mxu0 0.0
        %520 = vmatpush2.xpose.msra.mxu0 0.0
        %521 = vmatprep.subr.mxu0 0.0
        %522 = vmatpush2.xpose.msra.mxu0 0.0
        %523 = vmatprep.subr.mxu0 0.0
        %524 = vmatpush2.xpose.msra.mxu0 0.0
        %525 = vmatprep.subr.mxu0 0.0
        %526 = vmatpush2.xpose.msra.mxu0 0.0
        %527 = vmatprep.subr.mxu0 0.0
        %528 = vmatpush2.xpose.msra.mxu0 0.0
        %529 = vmatprep.subr.mxu0 0.0
        %530 = vmatpush2.xpose.msra.mxu0 0.0
        %531 = vmatprep.subr.mxu0 0.0
        %532 = vmatpush2.xpose.msra.mxu0 0.0
        %533 = vmatprep.mubr.f32.mxu0 0.0
        %534 = vmatmul.mubr.f32.gmra.mxu0 %v465
        %v535 = vpop.f32.mrf.mxu0
        %v536 = vadd.f32 0.0, %v535
        %v537 = vpop.f32.mrf.mxu0
        %538 = vdwg.mxu0
        %539 = vrot.lane.b32.xlu0 %v375, 96
        %v540 = vpop.permute.xlu0 %539
        %v541 = vsel %vm388, %v360, 0
        %v543 = vsel %vm388, %v540, 0
        %545 = vmatprep.subr.mxu0 0.0
        %546 = vmatpush1.xpose.msra.mxu0 0.0
        %547 = vmatprep.subr.mxu0 0.0
        %548 = vmatpush1.xpose.msra.mxu0 0.0
        %549 = vmatprep.subr.mxu0 0.0
        %550 = vmatpush1.xpose.msra.mxu0 0.0
        %551 = vmatprep.subr.mxu0 0.0
        %552 = vmatpush1.xpose.msra.mxu0 0.0
        %553 = vmatprep.subr.mxu0 0.0
        %554 = vmatpush1.xpose.msra.mxu0 0.0
        %555 = vmatprep.subr.mxu0 0.0
        %556 = vmatpush1.xpose.msra.mxu0 0.0
        %557 = vmatprep.subr.mxu0 0.0
        %558 = vmatpush1.xpose.msra.mxu0 0.0
        %559 = vmatprep.subr.mxu0 0.0
        %560 = vmatpush1.xpose.msra.mxu0 0.0
        %561 = vmatprep.subr.mxu0 0.0
        %562 = vmatpush1.xpose.msra.mxu0 0.0
        %563 = vmatprep.subr.mxu0 0.0
        %564 = vmatpush1.xpose.msra.mxu0 0.0
        %565 = vmatprep.subr.mxu0 0.0
        %566 = vmatpush1.xpose.msra.mxu0 0.0
        %567 = vmatprep.subr.mxu0 0.0
        %568 = vmatpush1.xpose.msra.mxu0 0.0
        %569 = vmatprep.subr.mxu0 0.0
        %570 = vmatpush1.xpose.msra.mxu0 0.0
        %571 = vmatprep.subr.mxu0 0.0
        %572 = vmatpush1.xpose.msra.mxu0 0.0
        %573 = vmatprep.subr.mxu0 0.0
        %574 = vmatpush1.xpose.msra.mxu0 0.0
        %575 = vmatprep.subr.mxu0 0.0
        %576 = vmatpush1.xpose.msra.mxu0 %v543
        %577 = vmatprep.subr.mxu0 0.0
        %578 = vmatpush2.xpose.msra.mxu0 0.0
        %579 = vmatprep.subr.mxu0 0.0
        %580 = vmatpush2.xpose.msra.mxu0 0.0
        %581 = vmatprep.subr.mxu0 0.0
        %582 = vmatpush2.xpose.msra.mxu0 0.0
        %583 = vmatprep.subr.mxu0 0.0
        %584 = vmatpush2.xpose.msra.mxu0 0.0
        %585 = vmatprep.subr.mxu0 0.0
        %586 = vmatpush2.xpose.msra.mxu0 0.0
        %587 = vmatprep.subr.mxu0 0.0
        %588 = vmatpush2.xpose.msra.mxu0 0.0
        %589 = vmatprep.subr.mxu0 0.0
        %590 = vmatpush2.xpose.msra.mxu0 0.0
        %591 = vmatprep.subr.mxu0 0.0
        %592 = vmatpush2.xpose.msra.mxu0 0.0
        %593 = vmatprep.subr.mxu0 0.0
        %594 = vmatpush2.xpose.msra.mxu0 0.0
        %595 = vmatprep.subr.mxu0 0.0
        %596 = vmatpush2.xpose.msra.mxu0 0.0
        %597 = vmatprep.subr.mxu0 0.0
        %598 = vmatpush2.xpose.msra.mxu0 0.0
        %599 = vmatprep.subr.mxu0 0.0
        %600 = vmatpush2.xpose.msra.mxu0 0.0
        %601 = vmatprep.subr.mxu0 0.0
        %602 = vmatpush2.xpose.msra.mxu0 0.0
        %603 = vmatprep.subr.mxu0 0.0
        %604 = vmatpush2.xpose.msra.mxu0 0.0
        %605 = vmatprep.subr.mxu0 0.0
        %606 = vmatpush2.xpose.msra.mxu0 0.0
        %607 = vmatprep.subr.mxu0 0.0
        %608 = vmatpush2.xpose.msra.mxu0 0.0
        %609 = vmatprep.mubr.f32.mxu0 0.0
        %610 = vmatmul.mubr.f32.gmra.mxu0 %v541
        %v611 = vpop.f32.mrf.mxu0
        %v612 = vadd.f32 0.0, %v611
        %v613 = vpop.f32.mrf.mxu0
        %614 = vdwg.mxu0
        %615 = vrot.lane.b32.xlu0 %v377, 96
        %v616 = vpop.permute.xlu0 %615
        %v617 = vsel %vm388, %v362, 0
        %v619 = vsel %vm388, %v616, 0
        %621 = vmatprep.subr.mxu0 0.0
        %622 = vmatpush1.xpose.msra.mxu0 0.0
        %623 = vmatprep.subr.mxu0 0.0
        %624 = vmatpush1.xpose.msra.mxu0 0.0
        %625 = vmatprep.subr.mxu0 0.0
        %626 = vmatpush1.xpose.msra.mxu0 0.0
        %627 = vmatprep.subr.mxu0 0.0
        %628 = vmatpush1.xpose.msra.mxu0 0.0
        %629 = vmatprep.subr.mxu0 0.0
        %630 = vmatpush1.xpose.msra.mxu0 0.0
        %631 = vmatprep.subr.mxu0 0.0
        %632 = vmatpush1.xpose.msra.mxu0 0.0
        %633 = vmatprep.subr.mxu0 0.0
        %634 = vmatpush1.xpose.msra.mxu0 0.0
        %635 = vmatprep.subr.mxu0 0.0
        %636 = vmatpush1.xpose.msra.mxu0 0.0
        %637 = vmatprep.subr.mxu0 0.0
        %638 = vmatpush1.xpose.msra.mxu0 0.0
        %639 = vmatprep.subr.mxu0 0.0
        %640 = vmatpush1.xpose.msra.mxu0 0.0
        %641 = vmatprep.subr.mxu0 0.0
        %642 = vmatpush1.xpose.msra.mxu0 0.0
        %643 = vmatprep.subr.mxu0 0.0
        %644 = vmatpush1.xpose.msra.mxu0 0.0
        %645 = vmatprep.subr.mxu0 0.0
        %646 = vmatpush1.xpose.msra.mxu0 0.0
        %647 = vmatprep.subr.mxu0 0.0
        %648 = vmatpush1.xpose.msra.mxu0 0.0
        %649 = vmatprep.subr.mxu0 0.0
        %650 = vmatpush1.xpose.msra.mxu0 0.0
        %651 = vmatprep.subr.mxu0 0.0
        %652 = vmatpush1.xpose.msra.mxu0 %v619
        %653 = vmatprep.subr.mxu0 0.0
        %654 = vmatpush2.xpose.msra.mxu0 0.0
        %655 = vmatprep.subr.mxu0 0.0
        %656 = vmatpush2.xpose.msra.mxu0 0.0
        %657 = vmatprep.subr.mxu0 0.0
        %658 = vmatpush2.xpose.msra.mxu0 0.0
        %659 = vmatprep.subr.mxu0 0.0
        %660 = vmatpush2.xpose.msra.mxu0 0.0
        %661 = vmatprep.subr.mxu0 0.0
        %662 = vmatpush2.xpose.msra.mxu0 0.0
        %663 = vmatprep.subr.mxu0 0.0
        %664 = vmatpush2.xpose.msra.mxu0 0.0
        %665 = vmatprep.subr.mxu0 0.0
        %666 = vmatpush2.xpose.msra.mxu0 0.0
        %667 = vmatprep.subr.mxu0 0.0
        %668 = vmatpush2.xpose.msra.mxu0 0.0
        %669 = vmatprep.subr.mxu0 0.0
        %670 = vmatpush2.xpose.msra.mxu0 0.0
        %671 = vmatprep.subr.mxu0 0.0
        %672 = vmatpush2.xpose.msra.mxu0 0.0
        %673 = vmatprep.subr.mxu0 0.0
        %674 = vmatpush2.xpose.msra.mxu0 0.0
        %675 = vmatprep.subr.mxu0 0.0
        %676 = vmatpush2.xpose.msra.mxu0 0.0
        %677 = vmatprep.subr.mxu0 0.0
        %678 = vmatpush2.xpose.msra.mxu0 0.0
        %679 = vmatprep.subr.mxu0 0.0
        %680 = vmatpush2.xpose.msra.mxu0 0.0
        %681 = vmatprep.subr.mxu0 0.0
        %682 = vmatpush2.xpose.msra.mxu0 0.0
        %683 = vmatprep.subr.mxu0 0.0
        %684 = vmatpush2.xpose.msra.mxu0 0.0
        %685 = vmatprep.mubr.f32.mxu0 0.0
        %686 = vmatmul.mubr.f32.gmra.mxu0 %v617
        %v687 = vpop.f32.mrf.mxu0
        %v688 = vadd.f32 0.0, %v687
        %v689 = vpop.f32.mrf.mxu0
        %690 = vdwg.mxu0
        %691 = vrot.lane.b32.xlu0 %v379, 96
        %v692 = vpop.permute.xlu0 %691
        %v693 = vsel %vm388, %v364, 0
        %v695 = vsel %vm388, %v692, 0
        %697 = vmatprep.subr.mxu0 0.0
        %698 = vmatpush1.xpose.msra.mxu0 0.0
        %699 = vmatprep.subr.mxu0 0.0
        %700 = vmatpush1.xpose.msra.mxu0 0.0
        %701 = vmatprep.subr.mxu0 0.0
        %702 = vmatpush1.xpose.msra.mxu0 0.0
        %703 = vmatprep.subr.mxu0 0.0
        %704 = vmatpush1.xpose.msra.mxu0 0.0
        %705 = vmatprep.subr.mxu0 0.0
        %706 = vmatpush1.xpose.msra.mxu0 0.0
        %707 = vmatprep.subr.mxu0 0.0
        %708 = vmatpush1.xpose.msra.mxu0 0.0
        %709 = vmatprep.subr.mxu0 0.0
        %710 = vmatpush1.xpose.msra.mxu0 0.0
        %711 = vmatprep.subr.mxu0 0.0
        %712 = vmatpush1.xpose.msra.mxu0 0.0
        %713 = vmatprep.subr.mxu0 0.0
        %714 = vmatpush1.xpose.msra.mxu0 0.0
        %715 = vmatprep.subr.mxu0 0.0
        %716 = vmatpush1.xpose.msra.mxu0 0.0
        %717 = vmatprep.subr.mxu0 0.0
        %718 = vmatpush1.xpose.msra.mxu0 0.0
        %719 = vmatprep.subr.mxu0 0.0
        %720 = vmatpush1.xpose.msra.mxu0 0.0
        %721 = vmatprep.subr.mxu0 0.0
        %722 = vmatpush1.xpose.msra.mxu0 0.0
        %723 = vmatprep.subr.mxu0 0.0
        %724 = vmatpush1.xpose.msra.mxu0 0.0
        %725 = vmatprep.subr.mxu0 0.0
        %726 = vmatpush1.xpose.msra.mxu0 0.0
        %727 = vmatprep.subr.mxu0 0.0
        %728 = vmatpush1.xpose.msra.mxu0 %v695
        %729 = vmatprep.subr.mxu0 0.0
        %730 = vmatpush2.xpose.msra.mxu0 0.0
        %731 = vmatprep.subr.mxu0 0.0
        %732 = vmatpush2.xpose.msra.mxu0 0.0
        %733 = vmatprep.subr.mxu0 0.0
        %734 = vmatpush2.xpose.msra.mxu0 0.0
        %735 = vmatprep.subr.mxu0 0.0
        %736 = vmatpush2.xpose.msra.mxu0 0.0
        %737 = vmatprep.subr.mxu0 0.0
        %738 = vmatpush2.xpose.msra.mxu0 0.0
        %739 = vmatprep.subr.mxu0 0.0
        %740 = vmatpush2.xpose.msra.mxu0 0.0
        %741 = vmatprep.subr.mxu0 0.0
        %742 = vmatpush2.xpose.msra.mxu0 0.0
        %743 = vmatprep.subr.mxu0 0.0
        %744 = vmatpush2.xpose.msra.mxu0 0.0
        %745 = vmatprep.subr.mxu0 0.0
        %746 = vmatpush2.xpose.msra.mxu0 0.0
        %747 = vmatprep.subr.mxu0 0.0
        %748 = vmatpush2.xpose.msra.mxu0 0.0
        %749 = vmatprep.subr.mxu0 0.0
        %750 = vmatpush2.xpose.msra.mxu0 0.0
        %751 = vmatprep.subr.mxu0 0.0
        %752 = vmatpush2.xpose.msra.mxu0 0.0
        %753 = vmatprep.subr.mxu0 0.0
        %754 = vmatpush2.xpose.msra.mxu0 0.0
        %755 = vmatprep.subr.mxu0 0.0
        %756 = vmatpush2.xpose.msra.mxu0 0.0
        %757 = vmatprep.subr.mxu0 0.0
        %758 = vmatpush2.xpose.msra.mxu0 0.0
        %759 = vmatprep.subr.mxu0 0.0
        %760 = vmatpush2.xpose.msra.mxu0 0.0
        %761 = vmatprep.mubr.f32.mxu0 0.0
        %762 = vmatmul.mubr.f32.gmra.mxu0 %v693
        %v763 = vpop.f32.mrf.mxu0
        %v764 = vadd.f32 0.0, %v763
        %v765 = vpop.f32.mrf.mxu0
        %766 = vdwg.mxu0
        %767 = vrot.lane.b32.xlu0 %v381, 96
        %v768 = vpop.permute.xlu0 %767
        %v769 = vsel %vm388, %v366, 0
        %v771 = vsel %vm388, %v768, 0
        %773 = vmatprep.subr.mxu0 0.0
        %774 = vmatpush1.xpose.msra.mxu0 0.0
        %775 = vmatprep.subr.mxu0 0.0
        %776 = vmatpush1.xpose.msra.mxu0 0.0
        %777 = vmatprep.subr.mxu0 0.0
        %778 = vmatpush1.xpose.msra.mxu0 0.0
        %779 = vmatprep.subr.mxu0 0.0
        %780 = vmatpush1.xpose.msra.mxu0 0.0
        %781 = vmatprep.subr.mxu0 0.0
        %782 = vmatpush1.xpose.msra.mxu0 0.0
        %783 = vmatprep.subr.mxu0 0.0
        %784 = vmatpush1.xpose.msra.mxu0 0.0
        %785 = vmatprep.subr.mxu0 0.0
        %786 = vmatpush1.xpose.msra.mxu0 0.0
        %787 = vmatprep.subr.mxu0 0.0
        %788 = vmatpush1.xpose.msra.mxu0 0.0
        %789 = vmatprep.subr.mxu0 0.0
        %790 = vmatpush1.xpose.msra.mxu0 0.0
        %791 = vmatprep.subr.mxu0 0.0
        %792 = vmatpush1.xpose.msra.mxu0 0.0
        %793 = vmatprep.subr.mxu0 0.0
        %794 = vmatpush1.xpose.msra.mxu0 0.0
        %795 = vmatprep.subr.mxu0 0.0
        %796 = vmatpush1.xpose.msra.mxu0 0.0
        %797 = vmatprep.subr.mxu0 0.0
        %798 = vmatpush1.xpose.msra.mxu0 0.0
        %799 = vmatprep.subr.mxu0 0.0
        %800 = vmatpush1.xpose.msra.mxu0 0.0
        %801 = vmatprep.subr.mxu0 0.0
        %802 = vmatpush1.xpose.msra.mxu0 0.0
        %803 = vmatprep.subr.mxu0 0.0
        %804 = vmatpush1.xpose.msra.mxu0 %v771
        %805 = vmatprep.subr.mxu0 0.0
        %806 = vmatpush2.xpose.msra.mxu0 0.0
        %807 = vmatprep.subr.mxu0 0.0
        %808 = vmatpush2.xpose.msra.mxu0 0.0
        %809 = vmatprep.subr.mxu0 0.0
        %810 = vmatpush2.xpose.msra.mxu0 0.0
        %811 = vmatprep.subr.mxu0 0.0
        %812 = vmatpush2.xpose.msra.mxu0 0.0
        %813 = vmatprep.subr.mxu0 0.0
        %814 = vmatpush2.xpose.msra.mxu0 0.0
        %815 = vmatprep.subr.mxu0 0.0
        %816 = vmatpush2.xpose.msra.mxu0 0.0
        %817 = vmatprep.subr.mxu0 0.0
        %818 = vmatpush2.xpose.msra.mxu0 0.0
        %819 = vmatprep.subr.mxu0 0.0
        %820 = vmatpush2.xpose.msra.mxu0 0.0
        %821 = vmatprep.subr.mxu0 0.0
        %822 = vmatpush2.xpose.msra.mxu0 0.0
        %823 = vmatprep.subr.mxu0 0.0
        %824 = vmatpush2.xpose.msra.mxu0 0.0
        %825 = vmatprep.subr.mxu0 0.0
        %826 = vmatpush2.xpose.msra.mxu0 0.0
        %827 = vmatprep.subr.mxu0 0.0
        %828 = vmatpush2.xpose.msra.mxu0 0.0
        %829 = vmatprep.subr.mxu0 0.0
        %830 = vmatpush2.xpose.msra.mxu0 0.0
        %831 = vmatprep.subr.mxu0 0.0
        %832 = vmatpush2.xpose.msra.mxu0 0.0
        %833 = vmatprep.subr.mxu0 0.0
        %834 = vmatpush2.xpose.msra.mxu0 0.0
        %835 = vmatprep.subr.mxu0 0.0
        %836 = vmatpush2.xpose.msra.mxu0 0.0
        %837 = vmatprep.mubr.f32.mxu0 0.0
        %838 = vmatmul.mubr.f32.gmra.mxu0 %v769
        %v839 = vpop.f32.mrf.mxu0
        %v840 = vadd.f32 0.0, %v839
        %v841 = vpop.f32.mrf.mxu0
        %842 = vdwg.mxu0
        %843 = vrot.lane.b32.xlu0 %v383, 96
        %v844 = vpop.permute.xlu0 %843
        %v845 = vsel %vm388, %v368, 0
        %v847 = vsel %vm388, %v844, 0
        %849 = vmatprep.subr.mxu0 0.0
        %850 = vmatpush1.xpose.msra.mxu0 0.0
        %851 = vmatprep.subr.mxu0 0.0
        %852 = vmatpush1.xpose.msra.mxu0 0.0
        %853 = vmatprep.subr.mxu0 0.0
        %854 = vmatpush1.xpose.msra.mxu0 0.0
        %855 = vmatprep.subr.mxu0 0.0
        %856 = vmatpush1.xpose.msra.mxu0 0.0
        %857 = vmatprep.subr.mxu0 0.0
        %858 = vmatpush1.xpose.msra.mxu0 0.0
        %859 = vmatprep.subr.mxu0 0.0
        %860 = vmatpush1.xpose.msra.mxu0 0.0
        %861 = vmatprep.subr.mxu0 0.0
        %862 = vmatpush1.xpose.msra.mxu0 0.0
        %863 = vmatprep.subr.mxu0 0.0
        %864 = vmatpush1.xpose.msra.mxu0 0.0
        %865 = vmatprep.subr.mxu0 0.0
        %866 = vmatpush1.xpose.msra.mxu0 0.0
        %867 = vmatprep.subr.mxu0 0.0
        %868 = vmatpush1.xpose.msra.mxu0 0.0
        %869 = vmatprep.subr.mxu0 0.0
        %870 = vmatpush1.xpose.msra.mxu0 0.0
        %871 = vmatprep.subr.mxu0 0.0
        %872 = vmatpush1.xpose.msra.mxu0 0.0
        %873 = vmatprep.subr.mxu0 0.0
        %874 = vmatpush1.xpose.msra.mxu0 0.0
        %875 = vmatprep.subr.mxu0 0.0
        %876 = vmatpush1.xpose.msra.mxu0 0.0
        %877 = vmatprep.subr.mxu0 0.0
        %878 = vmatpush1.xpose.msra.mxu0 0.0
        %879 = vmatprep.subr.mxu0 0.0
        %880 = vmatpush1.xpose.msra.mxu0 %v847
        %881 = vmatprep.subr.mxu0 0.0
        %882 = vmatpush2.xpose.msra.mxu0 0.0
        %883 = vmatprep.subr.mxu0 0.0
        %884 = vmatpush2.xpose.msra.mxu0 0.0
        %885 = vmatprep.subr.mxu0 0.0
        %886 = vmatpush2.xpose.msra.mxu0 0.0
        %887 = vmatprep.subr.mxu0 0.0
        %888 = vmatpush2.xpose.msra.mxu0 0.0
        %889 = vmatprep.subr.mxu0 0.0
        %890 = vmatpush2.xpose.msra.mxu0 0.0
        %891 = vmatprep.subr.mxu0 0.0
        %892 = vmatpush2.xpose.msra.mxu0 0.0
        %893 = vmatprep.subr.mxu0 0.0
        %894 = vmatpush2.xpose.msra.mxu0 0.0
        %895 = vmatprep.subr.mxu0 0.0
        %896 = vmatpush2.xpose.msra.mxu0 0.0
        %897 = vmatprep.subr.mxu0 0.0
        %898 = vmatpush2.xpose.msra.mxu0 0.0
        %899 = vmatprep.subr.mxu0 0.0
        %900 = vmatpush2.xpose.msra.mxu0 0.0
        %901 = vmatprep.subr.mxu0 0.0
        %902 = vmatpush2.xpose.msra.mxu0 0.0
        %903 = vmatprep.subr.mxu0 0.0
        %904 = vmatpush2.xpose.msra.mxu0 0.0
        %905 = vmatprep.subr.mxu0 0.0
        %906 = vmatpush2.xpose.msra.mxu0 0.0
        %907 = vmatprep.subr.mxu0 0.0
        %908 = vmatpush2.xpose.msra.mxu0 0.0
        %909 = vmatprep.subr.mxu0 0.0
        %910 = vmatpush2.xpose.msra.mxu0 0.0
        %911 = vmatprep.subr.mxu0 0.0
        %912 = vmatpush2.xpose.msra.mxu0 0.0
        %913 = vmatprep.mubr.f32.mxu0 0.0
        %914 = vmatmul.mubr.f32.gmra.mxu0 %v845
        %v915 = vpop.f32.mrf.mxu0
        %v916 = vadd.f32 0.0, %v915
        %v917 = vpop.f32.mrf.mxu0
        %918 = vdwg.mxu0
        %919 = vrot.lane.b32.xlu0 %v385, 96
        %v920 = vpop.permute.xlu0 %919
        %v921 = vsel %vm388, %v370, 0
        %v923 = vsel %vm388, %v920, 0
        %925 = vmatprep.subr.mxu0 0.0
        %926 = vmatpush1.xpose.msra.mxu0 0.0
        %927 = vmatprep.subr.mxu0 0.0
        %928 = vmatpush1.xpose.msra.mxu0 0.0
        %929 = vmatprep.subr.mxu0 0.0
        %930 = vmatpush1.xpose.msra.mxu0 0.0
        %931 = vmatprep.subr.mxu0 0.0
        %932 = vmatpush1.xpose.msra.mxu0 0.0
        %933 = vmatprep.subr.mxu0 0.0
        %934 = vmatpush1.xpose.msra.mxu0 0.0
        %935 = vmatprep.subr.mxu0 0.0
        %936 = vmatpush1.xpose.msra.mxu0 0.0
        %937 = vmatprep.subr.mxu0 0.0
        %938 = vmatpush1.xpose.msra.mxu0 0.0
        %939 = vmatprep.subr.mxu0 0.0
        %940 = vmatpush1.xpose.msra.mxu0 0.0
        %941 = vmatprep.subr.mxu0 0.0
        %942 = vmatpush1.xpose.msra.mxu0 0.0
        %943 = vmatprep.subr.mxu0 0.0
        %944 = vmatpush1.xpose.msra.mxu0 0.0
        %945 = vmatprep.subr.mxu0 0.0
        %946 = vmatpush1.xpose.msra.mxu0 0.0
        %947 = vmatprep.subr.mxu0 0.0
        %948 = vmatpush1.xpose.msra.mxu0 0.0
        %949 = vmatprep.subr.mxu0 0.0
        %950 = vmatpush1.xpose.msra.mxu0 0.0
        %951 = vmatprep.subr.mxu0 0.0
        %952 = vmatpush1.xpose.msra.mxu0 0.0
        %953 = vmatprep.subr.mxu0 0.0
        %954 = vmatpush1.xpose.msra.mxu0 0.0
        %955 = vmatprep.subr.mxu0 0.0
        %956 = vmatpush1.xpose.msra.mxu0 %v923
        %957 = vmatprep.subr.mxu0 0.0
        %958 = vmatpush2.xpose.msra.mxu0 0.0
        %959 = vmatprep.subr.mxu0 0.0
        %960 = vmatpush2.xpose.msra.mxu0 0.0
        %961 = vmatprep.subr.mxu0 0.0
        %962 = vmatpush2.xpose.msra.mxu0 0.0
        %963 = vmatprep.subr.mxu0 0.0
        %964 = vmatpush2.xpose.msra.mxu0 0.0
        %965 = vmatprep.subr.mxu0 0.0
        %966 = vmatpush2.xpose.msra.mxu0 0.0
        %967 = vmatprep.subr.mxu0 0.0
        %968 = vmatpush2.xpose.msra.mxu0 0.0
        %969 = vmatprep.subr.mxu0 0.0
        %970 = vmatpush2.xpose.msra.mxu0 0.0
        %971 = vmatprep.subr.mxu0 0.0
        %972 = vmatpush2.xpose.msra.mxu0 0.0
        %973 = vmatprep.subr.mxu0 0.0
        %974 = vmatpush2.xpose.msra.mxu0 0.0
        %975 = vmatprep.subr.mxu0 0.0
        %976 = vmatpush2.xpose.msra.mxu0 0.0
        %977 = vmatprep.subr.mxu0 0.0
        %978 = vmatpush2.xpose.msra.mxu0 0.0
        %979 = vmatprep.subr.mxu0 0.0
        %980 = vmatpush2.xpose.msra.mxu0 0.0
        %981 = vmatprep.subr.mxu0 0.0
        %982 = vmatpush2.xpose.msra.mxu0 0.0
        %983 = vmatprep.subr.mxu0 0.0
        %984 = vmatpush2.xpose.msra.mxu0 0.0
        %985 = vmatprep.subr.mxu0 0.0
        %986 = vmatpush2.xpose.msra.mxu0 0.0
        %987 = vmatprep.subr.mxu0 0.0
        %988 = vmatpush2.xpose.msra.mxu0 0.0
        %989 = vmatprep.mubr.f32.mxu0 0.0
        %990 = vmatmul.mubr.f32.gmra.mxu0 %v921
        %v991 = vpop.f32.mrf.mxu0
        %v992 = vadd.f32 0.0, %v991
        %v993 = vpop.f32.mrf.mxu0
        %994 = vdwg.mxu0
        %vm995 = vcmask 64512
        %v996 = vsel %vm995, %v460, -inf
        %997 = vmax.xlane.f32.xlu0 %v996
        %v998 = vpop.xlane.xlu0 %997
        %v999 = vsel %vm995, %v536, -inf
        %1000 = vmax.xlane.f32.xlu0 %v999
        %v1001 = vpop.xlane.xlu0 %1000
        %v1002 = vsel %vm995, %v612, -inf
        %1003 = vmax.xlane.f32.xlu0 %v1002
        %v1004 = vpop.xlane.xlu0 %1003
        %v1005 = vsel %vm995, %v688, -inf
        %1006 = vmax.xlane.f32.xlu0 %v1005
        %v1007 = vpop.xlane.xlu0 %1006
        %v1008 = vsel %vm995, %v764, -inf
        %1009 = vmax.xlane.f32.xlu0 %v1008
        %v1010 = vpop.xlane.xlu0 %1009
        %v1011 = vsel %vm995, %v840, -inf
        %1012 = vmax.xlane.f32.xlu0 %v1011
        %v1013 = vpop.xlane.xlu0 %1012
        %v1014 = vsel %vm995, %v916, -inf
        %1015 = vmax.xlane.f32.xlu0 %v1014
        %v1016 = vpop.xlane.xlu0 %1015
        %v1017 = vsel %vm995, %v992, -inf
        %1018 = vmax.xlane.f32.xlu0 %v1017
        %v1019 = vpop.xlane.xlu0 %1018
        %v1020 = vsub.f32 %v460, %v998
        %v1021 = vsub.f32 %v536, %v1001
        %v1022 = vsub.f32 %v612, %v1004
        %v1023 = vsub.f32 %v688, %v1007
        %v1024 = vsub.f32 %v764, %v1010
        %v1025 = vsub.f32 %v840, %v1013
        %v1026 = vsub.f32 %v916, %v1016
        %v1027 = vsub.f32 %v992, %v1019
        %v1028 = vmul.f32 %v1020, 1.442695
        %v1029 = vpow.pop %v1028
        %v1030 = vmul.f32 %v1021, 1.442695
        %v1031 = vpow.pop %v1030
        %v1032 = vmul.f32 %v1022, 1.442695
        %v1033 = vpow.pop %v1032
        %v1034 = vmul.f32 %v1023, 1.442695
        %v1035 = vpow.pop %v1034
        %v1036 = vmul.f32 %v1024, 1.442695
        %v1037 = vpow.pop %v1036
        %v1038 = vmul.f32 %v1025, 1.442695
        %v1039 = vpow.pop %v1038
        %v1040 = vmul.f32 %v1026, 1.442695
        %v1041 = vpow.pop %v1040
        %v1042 = vmul.f32 %v1027, 1.442695
        %v1043 = vpow.pop %v1042
        %v1044 = vsel %vm995, %v1029, 0.0
        %1045 = vadd.xlane.f32.xlu0 %v1044
        %v1046 = vpop.xlane.xlu0 %1045
        %v1047 = vsel %vm995, %v1031, 0.0
        %1048 = vadd.xlane.f32.xlu0 %v1047
        %v1049 = vpop.xlane.xlu0 %1048
        %v1050 = vsel %vm995, %v1033, 0.0
        %1051 = vadd.xlane.f32.xlu0 %v1050
        %v1052 = vpop.xlane.xlu0 %1051
        %v1053 = vsel %vm995, %v1035, 0.0
        %1054 = vadd.xlane.f32.xlu0 %v1053
        %v1055 = vpop.xlane.xlu0 %1054
        %v1056 = vsel %vm995, %v1037, 0.0
        %1057 = vadd.xlane.f32.xlu0 %v1056
        %v1058 = vpop.xlane.xlu0 %1057
        %v1059 = vsel %vm995, %v1039, 0.0
        %1060 = vadd.xlane.f32.xlu0 %v1059
        %v1061 = vpop.xlane.xlu0 %1060
        %v1062 = vsel %vm995, %v1041, 0.0
        %1063 = vadd.xlane.f32.xlu0 %v1062
        %v1064 = vpop.xlane.xlu0 %1063
        %v1065 = vsel %vm995, %v1043, 0.0
        %1066 = vadd.xlane.f32.xlu0 %v1065
        %v1067 = vpop.xlane.xlu0 %1066
        %1068 = vrot.lane.b32.xlu0 %v352, 64
        %v1069 = vpop.permute.xlu0 %1068
        %v1072 = vsel %vm995, %v1029, 0
        %1074 = vmatprep.subr.mxu0 0.0
        %1075 = vmatpush1.msra.mxu0 0.0
        %1076 = vmatprep.subr.mxu0 0.0
        %1077 = vmatpush1.msra.mxu0 0.0
        %1078 = vmatprep.subr.mxu0 0.0
        %1079 = vmatpush1.msra.mxu0 0.0
        %1080 = vmatprep.subr.mxu0 0.0
        %1081 = vmatpush1.msra.mxu0 0.0
        %1082 = vmatprep.subr.mxu0 0.0
        %1083 = vmatpush1.msra.mxu0 0.0
        %1084 = vmatprep.subr.mxu0 0.0
        %1085 = vmatpush1.msra.mxu0 0.0
        %1086 = vmatprep.subr.mxu0 0.0
        %1087 = vmatpush1.msra.mxu0 0.0
        %1088 = vmatprep.subr.mxu0 0.0
        %1089 = vmatpush1.msra.mxu0 0.0
        %1090 = vmatprep.subr.mxu0 0.0
        %1091 = vmatpush1.msra.mxu0 0.0
        %1092 = vmatprep.subr.mxu0 0.0
        %1093 = vmatpush1.msra.mxu0 0.0
        %1094 = vmatprep.subr.mxu0 0.0
        %1095 = vmatpush1.msra.mxu0 0.0
        %1096 = vmatprep.subr.mxu0 0.0
        %1097 = vmatpush1.msra.mxu0 0.0
        %1098 = vmatprep.subr.mxu0 0.0
        %1099 = vmatpush1.msra.mxu0 0.0
        %1100 = vmatprep.subr.mxu0 0.0
        %1101 = vmatpush1.msra.mxu0 0.0
        %1102 = vmatprep.subr.mxu0 0.0
        %1103 = vmatpush1.msra.mxu0 0.0
        %1104 = vmatprep.subr.mxu0 0.0
        %1105 = vmatpush1.msra.mxu0 %v1069
        %1106 = vmatprep.subr.mxu0 0.0
        %1107 = vmatpush2.msra.mxu0 0.0
        %1108 = vmatprep.subr.mxu0 0.0
        %1109 = vmatpush2.msra.mxu0 0.0
        %1110 = vmatprep.subr.mxu0 0.0
        %1111 = vmatpush2.msra.mxu0 0.0
        %1112 = vmatprep.subr.mxu0 0.0
        %1113 = vmatpush2.msra.mxu0 0.0
        %1114 = vmatprep.subr.mxu0 0.0
        %1115 = vmatpush2.msra.mxu0 0.0
        %1116 = vmatprep.subr.mxu0 0.0
        %1117 = vmatpush2.msra.mxu0 0.0
        %1118 = vmatprep.subr.mxu0 0.0
        %1119 = vmatpush2.msra.mxu0 0.0
        %1120 = vmatprep.subr.mxu0 0.0
        %1121 = vmatpush2.msra.mxu0 0.0
        %1122 = vmatprep.subr.mxu0 0.0
        %1123 = vmatpush2.msra.mxu0 0.0
        %1124 = vmatprep.subr.mxu0 0.0
        %1125 = vmatpush2.msra.mxu0 0.0
        %1126 = vmatprep.subr.mxu0 0.0
        %1127 = vmatpush2.msra.mxu0 0.0
        %1128 = vmatprep.subr.mxu0 0.0
        %1129 = vmatpush2.msra.mxu0 0.0
        %1130 = vmatprep.subr.mxu0 0.0
        %1131 = vmatpush2.msra.mxu0 0.0
        %1132 = vmatprep.subr.mxu0 0.0
        %1133 = vmatpush2.msra.mxu0 0.0
        %1134 = vmatprep.subr.mxu0 0.0
        %1135 = vmatpush2.msra.mxu0 0.0
        %1136 = vmatprep.subr.mxu0 0.0
        %1137 = vmatpush2.msra.mxu0 0.0
        %1138 = vmatprep.mubr.f32.mxu0 0.0
        %1139 = vmatmul.mubr.f32.gmra.mxu0 %v1072
        %v1140 = vpop.f32.mrf.mxu0
        %v1141 = vadd.f32 0.0, %v1140
        %v1142 = vpop.f32.mrf.mxu0
        %1143 = vdwg.mxu0
        %1144 = vrot.lane.b32.xlu0 %v373, 64
        %v1145 = vpop.permute.xlu0 %1144
        %v1148 = vsel %vm995, %v1031, 0
        %1150 = vmatprep.subr.mxu0 0.0
        %1151 = vmatpush1.msra.mxu0 0.0
        %1152 = vmatprep.subr.mxu0 0.0
        %1153 = vmatpush1.msra.mxu0 0.0
        %1154 = vmatprep.subr.mxu0 0.0
        %1155 = vmatpush1.msra.mxu0 0.0
        %1156 = vmatprep.subr.mxu0 0.0
        %1157 = vmatpush1.msra.mxu0 0.0
        %1158 = vmatprep.subr.mxu0 0.0
        %1159 = vmatpush1.msra.mxu0 0.0
        %1160 = vmatprep.subr.mxu0 0.0
        %1161 = vmatpush1.msra.mxu0 0.0
        %1162 = vmatprep.subr.mxu0 0.0
        %1163 = vmatpush1.msra.mxu0 0.0
        %1164 = vmatprep.subr.mxu0 0.0
        %1165 = vmatpush1.msra.mxu0 0.0
        %1166 = vmatprep.subr.mxu0 0.0
        %1167 = vmatpush1.msra.mxu0 0.0
        %1168 = vmatprep.subr.mxu0 0.0
        %1169 = vmatpush1.msra.mxu0 0.0
        %1170 = vmatprep.subr.mxu0 0.0
        %1171 = vmatpush1.msra.mxu0 0.0
        %1172 = vmatprep.subr.mxu0 0.0
        %1173 = vmatpush1.msra.mxu0 0.0
        %1174 = vmatprep.subr.mxu0 0.0
        %1175 = vmatpush1.msra.mxu0 0.0
        %1176 = vmatprep.subr.mxu0 0.0
        %1177 = vmatpush1.msra.mxu0 0.0
        %1178 = vmatprep.subr.mxu0 0.0
        %1179 = vmatpush1.msra.mxu0 0.0
        %1180 = vmatprep.subr.mxu0 0.0
        %1181 = vmatpush1.msra.mxu0 %v1145
        %1182 = vmatprep.subr.mxu0 0.0
        %1183 = vmatpush2.msra.mxu0 0.0
        %1184 = vmatprep.subr.mxu0 0.0
        %1185 = vmatpush2.msra.mxu0 0.0
        %1186 = vmatprep.subr.mxu0 0.0
        %1187 = vmatpush2.msra.mxu0 0.0
        %1188 = vmatprep.subr.mxu0 0.0
        %1189 = vmatpush2.msra.mxu0 0.0
        %1190 = vmatprep.subr.mxu0 0.0
        %1191 = vmatpush2.msra.mxu0 0.0
        %1192 = vmatprep.subr.mxu0 0.0
        %1193 = vmatpush2.msra.mxu0 0.0
        %1194 = vmatprep.subr.mxu0 0.0
        %1195 = vmatpush2.msra.mxu0 0.0
        %1196 = vmatprep.subr.mxu0 0.0
        %1197 = vmatpush2.msra.mxu0 0.0
        %1198 = vmatprep.subr.mxu0 0.0
        %1199 = vmatpush2.msra.mxu0 0.0
        %1200 = vmatprep.subr.mxu0 0.0
        %1201 = vmatpush2.msra.mxu0 0.0
        %1202 = vmatprep.subr.mxu0 0.0
        %1203 = vmatpush2.msra.mxu0 0.0
        %1204 = vmatprep.subr.mxu0 0.0
        %1205 = vmatpush2.msra.mxu0 0.0
        %1206 = vmatprep.subr.mxu0 0.0
        %1207 = vmatpush2.msra.mxu0 0.0
        %1208 = vmatprep.subr.mxu0 0.0
        %1209 = vmatpush2.msra.mxu0 0.0
        %1210 = vmatprep.subr.mxu0 0.0
        %1211 = vmatpush2.msra.mxu0 0.0
        %1212 = vmatprep.subr.mxu0 0.0
        %1213 = vmatpush2.msra.mxu0 0.0
        %1214 = vmatprep.mubr.f32.mxu0 0.0
        %1215 = vmatmul.mubr.f32.gmra.mxu0 %v1148
        %v1216 = vpop.f32.mrf.mxu0
        %v1217 = vadd.f32 0.0, %v1216
        %v1218 = vpop.f32.mrf.mxu0
        %1219 = vdwg.mxu0
        %1220 = vrot.lane.b32.xlu0 %v375, 64
        %v1221 = vpop.permute.xlu0 %1220
        %v1224 = vsel %vm995, %v1033, 0
        %1226 = vmatprep.subr.mxu0 0.0
        %1227 = vmatpush1.msra.mxu0 0.0
        %1228 = vmatprep.subr.mxu0 0.0
        %1229 = vmatpush1.msra.mxu0 0.0
        %1230 = vmatprep.subr.mxu0 0.0
        %1231 = vmatpush1.msra.mxu0 0.0
        %1232 = vmatprep.subr.mxu0 0.0
        %1233 = vmatpush1.msra.mxu0 0.0
        %1234 = vmatprep.subr.mxu0 0.0
        %1235 = vmatpush1.msra.mxu0 0.0
        %1236 = vmatprep.subr.mxu0 0.0
        %1237 = vmatpush1.msra.mxu0 0.0
        %1238 = vmatprep.subr.mxu0 0.0
        %1239 = vmatpush1.msra.mxu0 0.0
        %1240 = vmatprep.subr.mxu0 0.0
        %1241 = vmatpush1.msra.mxu0 0.0
        %1242 = vmatprep.subr.mxu0 0.0
        %1243 = vmatpush1.msra.mxu0 0.0
        %1244 = vmatprep.subr.mxu0 0.0
        %1245 = vmatpush1.msra.mxu0 0.0
        %1246 = vmatprep.subr.mxu0 0.0
        %1247 = vmatpush1.msra.mxu0 0.0
        %1248 = vmatprep.subr.mxu0 0.0
        %1249 = vmatpush1.msra.mxu0 0.0
        %1250 = vmatprep.subr.mxu0 0.0
        %1251 = vmatpush1.msra.mxu0 0.0
        %1252 = vmatprep.subr.mxu0 0.0
        %1253 = vmatpush1.msra.mxu0 0.0
        %1254 = vmatprep.subr.mxu0 0.0
        %1255 = vmatpush1.msra.mxu0 0.0
        %1256 = vmatprep.subr.mxu0 0.0
        %1257 = vmatpush1.msra.mxu0 %v1221
        %1258 = vmatprep.subr.mxu0 0.0
        %1259 = vmatpush2.msra.mxu0 0.0
        %1260 = vmatprep.subr.mxu0 0.0
        %1261 = vmatpush2.msra.mxu0 0.0
        %1262 = vmatprep.subr.mxu0 0.0
        %1263 = vmatpush2.msra.mxu0 0.0
        %1264 = vmatprep.subr.mxu0 0.0
        %1265 = vmatpush2.msra.mxu0 0.0
        %1266 = vmatprep.subr.mxu0 0.0
        %1267 = vmatpush2.msra.mxu0 0.0
        %1268 = vmatprep.subr.mxu0 0.0
        %1269 = vmatpush2.msra.mxu0 0.0
        %1270 = vmatprep.subr.mxu0 0.0
        %1271 = vmatpush2.msra.mxu0 0.0
        %1272 = vmatprep.subr.mxu0 0.0
        %1273 = vmatpush2.msra.mxu0 0.0
        %1274 = vmatprep.subr.mxu0 0.0
        %1275 = vmatpush2.msra.mxu0 0.0
        %1276 = vmatprep.subr.mxu0 0.0
        %1277 = vmatpush2.msra.mxu0 0.0
        %1278 = vmatprep.subr.mxu0 0.0
        %1279 = vmatpush2.msra.mxu0 0.0
        %1280 = vmatprep.subr.mxu0 0.0
        %1281 = vmatpush2.msra.mxu0 0.0
        %1282 = vmatprep.subr.mxu0 0.0
        %1283 = vmatpush2.msra.mxu0 0.0
        %1284 = vmatprep.subr.mxu0 0.0
        %1285 = vmatpush2.msra.mxu0 0.0
        %1286 = vmatprep.subr.mxu0 0.0
        %1287 = vmatpush2.msra.mxu0 0.0
        %1288 = vmatprep.subr.mxu0 0.0
        %1289 = vmatpush2.msra.mxu0 0.0
        %1290 = vmatprep.mubr.f32.mxu0 0.0
        %1291 = vmatmul.mubr.f32.gmra.mxu0 %v1224
        %v1292 = vpop.f32.mrf.mxu0
        %v1293 = vadd.f32 0.0, %v1292
        %v1294 = vpop.f32.mrf.mxu0
        %1295 = vdwg.mxu0
        %1296 = vrot.lane.b32.xlu0 %v377, 64
        %v1297 = vpop.permute.xlu0 %1296
        %v1300 = vsel %vm995, %v1035, 0
        %1302 = vmatprep.subr.mxu0 0.0
        %1303 = vmatpush1.msra.mxu0 0.0
        %1304 = vmatprep.subr.mxu0 0.0
        %1305 = vmatpush1.msra.mxu0 0.0
        %1306 = vmatprep.subr.mxu0 0.0
        %1307 = vmatpush1.msra.mxu0 0.0
        %1308 = vmatprep.subr.mxu0 0.0
        %1309 = vmatpush1.msra.mxu0 0.0
        %1310 = vmatprep.subr.mxu0 0.0
        %1311 = vmatpush1.msra.mxu0 0.0
        %1312 = vmatprep.subr.mxu0 0.0
        %1313 = vmatpush1.msra.mxu0 0.0
        %1314 = vmatprep.subr.mxu0 0.0
        %1315 = vmatpush1.msra.mxu0 0.0
        %1316 = vmatprep.subr.mxu0 0.0
        %1317 = vmatpush1.msra.mxu0 0.0
        %1318 = vmatprep.subr.mxu0 0.0
        %1319 = vmatpush1.msra.mxu0 0.0
        %1320 = vmatprep.subr.mxu0 0.0
        %1321 = vmatpush1.msra.mxu0 0.0
        %1322 = vmatprep.subr.mxu0 0.0
        %1323 = vmatpush1.msra.mxu0 0.0
        %1324 = vmatprep.subr.mxu0 0.0
        %1325 = vmatpush1.msra.mxu0 0.0
        %1326 = vmatprep.subr.mxu0 0.0
        %1327 = vmatpush1.msra.mxu0 0.0
        %1328 = vmatprep.subr.mxu0 0.0
        %1329 = vmatpush1.msra.mxu0 0.0
        %1330 = vmatprep.subr.mxu0 0.0
        %1331 = vmatpush1.msra.mxu0 0.0
        %1332 = vmatprep.subr.mxu0 0.0
        %1333 = vmatpush1.msra.mxu0 %v1297
        %1334 = vmatprep.subr.mxu0 0.0
        %1335 = vmatpush2.msra.mxu0 0.0
        %1336 = vmatprep.subr.mxu0 0.0
        %1337 = vmatpush2.msra.mxu0 0.0
        %1338 = vmatprep.subr.mxu0 0.0
        %1339 = vmatpush2.msra.mxu0 0.0
        %1340 = vmatprep.subr.mxu0 0.0
        %1341 = vmatpush2.msra.mxu0 0.0
        %1342 = vmatprep.subr.mxu0 0.0
        %1343 = vmatpush2.msra.mxu0 0.0
        %1344 = vmatprep.subr.mxu0 0.0
        %1345 = vmatpush2.msra.mxu0 0.0
        %1346 = vmatprep.subr.mxu0 0.0
        %1347 = vmatpush2.msra.mxu0 0.0
        %1348 = vmatprep.subr.mxu0 0.0
        %1349 = vmatpush2.msra.mxu0 0.0
        %1350 = vmatprep.subr.mxu0 0.0
        %1351 = vmatpush2.msra.mxu0 0.0
        %1352 = vmatprep.subr.mxu0 0.0
        %1353 = vmatpush2.msra.mxu0 0.0
        %1354 = vmatprep.subr.mxu0 0.0
        %1355 = vmatpush2.msra.mxu0 0.0
        %1356 = vmatprep.subr.mxu0 0.0
        %1357 = vmatpush2.msra.mxu0 0.0
        %1358 = vmatprep.subr.mxu0 0.0
        %1359 = vmatpush2.msra.mxu0 0.0
        %1360 = vmatprep.subr.mxu0 0.0
        %1361 = vmatpush2.msra.mxu0 0.0
        %1362 = vmatprep.subr.mxu0 0.0
        %1363 = vmatpush2.msra.mxu0 0.0
        %1364 = vmatprep.subr.mxu0 0.0
        %1365 = vmatpush2.msra.mxu0 0.0
        %1366 = vmatprep.mubr.f32.mxu0 0.0
        %1367 = vmatmul.mubr.f32.gmra.mxu0 %v1300
        %v1368 = vpop.f32.mrf.mxu0
        %v1369 = vadd.f32 0.0, %v1368
        %v1370 = vpop.f32.mrf.mxu0
        %1371 = vdwg.mxu0
        %1372 = vrot.lane.b32.xlu0 %v379, 64
        %v1373 = vpop.permute.xlu0 %1372
        %v1376 = vsel %vm995, %v1037, 0
        %1378 = vmatprep.subr.mxu0 0.0
        %1379 = vmatpush1.msra.mxu0 0.0
        %1380 = vmatprep.subr.mxu0 0.0
        %1381 = vmatpush1.msra.mxu0 0.0
        %1382 = vmatprep.subr.mxu0 0.0
        %1383 = vmatpush1.msra.mxu0 0.0
        %1384 = vmatprep.subr.mxu0 0.0
        %1385 = vmatpush1.msra.mxu0 0.0
        %1386 = vmatprep.subr.mxu0 0.0
        %1387 = vmatpush1.msra.mxu0 0.0
        %1388 = vmatprep.subr.mxu0 0.0
        %1389 = vmatpush1.msra.mxu0 0.0
        %1390 = vmatprep.subr.mxu0 0.0
        %1391 = vmatpush1.msra.mxu0 0.0
        %1392 = vmatprep.subr.mxu0 0.0
        %1393 = vmatpush1.msra.mxu0 0.0
        %1394 = vmatprep.subr.mxu0 0.0
        %1395 = vmatpush1.msra.mxu0 0.0
        %1396 = vmatprep.subr.mxu0 0.0
        %1397 = vmatpush1.msra.mxu0 0.0
        %1398 = vmatprep.subr.mxu0 0.0
        %1399 = vmatpush1.msra.mxu0 0.0
        %1400 = vmatprep.subr.mxu0 0.0
        %1401 = vmatpush1.msra.mxu0 0.0
        %1402 = vmatprep.subr.mxu0 0.0
        %1403 = vmatpush1.msra.mxu0 0.0
        %1404 = vmatprep.subr.mxu0 0.0
        %1405 = vmatpush1.msra.mxu0 0.0
        %1406 = vmatprep.subr.mxu0 0.0
        %1407 = vmatpush1.msra.mxu0 0.0
        %1408 = vmatprep.subr.mxu0 0.0
        %1409 = vmatpush1.msra.mxu0 %v1373
        %1410 = vmatprep.subr.mxu0 0.0
        %1411 = vmatpush2.msra.mxu0 0.0
        %1412 = vmatprep.subr.mxu0 0.0
        %1413 = vmatpush2.msra.mxu0 0.0
        %1414 = vmatprep.subr.mxu0 0.0
        %1415 = vmatpush2.msra.mxu0 0.0
        %1416 = vmatprep.subr.mxu0 0.0
        %1417 = vmatpush2.msra.mxu0 0.0
        %1418 = vmatprep.subr.mxu0 0.0
        %1419 = vmatpush2.msra.mxu0 0.0
        %1420 = vmatprep.subr.mxu0 0.0
        %1421 = vmatpush2.msra.mxu0 0.0
        %1422 = vmatprep.subr.mxu0 0.0
        %1423 = vmatpush2.msra.mxu0 0.0
        %1424 = vmatprep.subr.mxu0 0.0
        %1425 = vmatpush2.msra.mxu0 0.0
        %1426 = vmatprep.subr.mxu0 0.0
        %1427 = vmatpush2.msra.mxu0 0.0
        %1428 = vmatprep.subr.mxu0 0.0
        %1429 = vmatpush2.msra.mxu0 0.0
        %1430 = vmatprep.subr.mxu0 0.0
        %1431 = vmatpush2.msra.mxu0 0.0
        %1432 = vmatprep.subr.mxu0 0.0
        %1433 = vmatpush2.msra.mxu0 0.0
        %1434 = vmatprep.subr.mxu0 0.0
        %1435 = vmatpush2.msra.mxu0 0.0
        %1436 = vmatprep.subr.mxu0 0.0
        %1437 = vmatpush2.msra.mxu0 0.0
        %1438 = vmatprep.subr.mxu0 0.0
        %1439 = vmatpush2.msra.mxu0 0.0
        %1440 = vmatprep.subr.mxu0 0.0
        %1441 = vmatpush2.msra.mxu0 0.0
        %1442 = vmatprep.mubr.f32.mxu0 0.0
        %1443 = vmatmul.mubr.f32.gmra.mxu0 %v1376
        %v1444 = vpop.f32.mrf.mxu0
        %v1445 = vadd.f32 0.0, %v1444
        %v1446 = vpop.f32.mrf.mxu0
        %1447 = vdwg.mxu0
        %1448 = vrot.lane.b32.xlu0 %v381, 64
        %v1449 = vpop.permute.xlu0 %1448
        %v1452 = vsel %vm995, %v1039, 0
        %1454 = vmatprep.subr.mxu0 0.0
        %1455 = vmatpush1.msra.mxu0 0.0
        %1456 = vmatprep.subr.mxu0 0.0
        %1457 = vmatpush1.msra.mxu0 0.0
        %1458 = vmatprep.subr.mxu0 0.0
        %1459 = vmatpush1.msra.mxu0 0.0
        %1460 = vmatprep.subr.mxu0 0.0
        %1461 = vmatpush1.msra.mxu0 0.0
        %1462 = vmatprep.subr.mxu0 0.0
        %1463 = vmatpush1.msra.mxu0 0.0
        %1464 = vmatprep.subr.mxu0 0.0
        %1465 = vmatpush1.msra.mxu0 0.0
        %1466 = vmatprep.subr.mxu0 0.0
        %1467 = vmatpush1.msra.mxu0 0.0
        %1468 = vmatprep.subr.mxu0 0.0
        %1469 = vmatpush1.msra.mxu0 0.0
        %1470 = vmatprep.subr.mxu0 0.0
        %1471 = vmatpush1.msra.mxu0 0.0
        %1472 = vmatprep.subr.mxu0 0.0
        %1473 = vmatpush1.msra.mxu0 0.0
        %1474 = vmatprep.subr.mxu0 0.0
        %1475 = vmatpush1.msra.mxu0 0.0
        %1476 = vmatprep.subr.mxu0 0.0
        %1477 = vmatpush1.msra.mxu0 0.0
        %1478 = vmatprep.subr.mxu0 0.0
        %1479 = vmatpush1.msra.mxu0 0.0
        %1480 = vmatprep.subr.mxu0 0.0
        %1481 = vmatpush1.msra.mxu0 0.0
        %1482 = vmatprep.subr.mxu0 0.0
        %1483 = vmatpush1.msra.mxu0 0.0
        %1484 = vmatprep.subr.mxu0 0.0
        %1485 = vmatpush1.msra.mxu0 %v1449
        %1486 = vmatprep.subr.mxu0 0.0
        %1487 = vmatpush2.msra.mxu0 0.0
        %1488 = vmatprep.subr.mxu0 0.0
        %1489 = vmatpush2.msra.mxu0 0.0
        %1490 = vmatprep.subr.mxu0 0.0
        %1491 = vmatpush2.msra.mxu0 0.0
        %1492 = vmatprep.subr.mxu0 0.0
        %1493 = vmatpush2.msra.mxu0 0.0
        %1494 = vmatprep.subr.mxu0 0.0
        %1495 = vmatpush2.msra.mxu0 0.0
        %1496 = vmatprep.subr.mxu0 0.0
        %1497 = vmatpush2.msra.mxu0 0.0
        %1498 = vmatprep.subr.mxu0 0.0
        %1499 = vmatpush2.msra.mxu0 0.0
        %1500 = vmatprep.subr.mxu0 0.0
        %1501 = vmatpush2.msra.mxu0 0.0
        %1502 = vmatprep.subr.mxu0 0.0
        %1503 = vmatpush2.msra.mxu0 0.0
        %1504 = vmatprep.subr.mxu0 0.0
        %1505 = vmatpush2.msra.mxu0 0.0
        %1506 = vmatprep.subr.mxu0 0.0
        %1507 = vmatpush2.msra.mxu0 0.0
        %1508 = vmatprep.subr.mxu0 0.0
        %1509 = vmatpush2.msra.mxu0 0.0
        %1510 = vmatprep.subr.mxu0 0.0
        %1511 = vmatpush2.msra.mxu0 0.0
        %1512 = vmatprep.subr.mxu0 0.0
        %1513 = vmatpush2.msra.mxu0 0.0
        %1514 = vmatprep.subr.mxu0 0.0
        %1515 = vmatpush2.msra.mxu0 0.0
        %1516 = vmatprep.subr.mxu0 0.0
        %1517 = vmatpush2.msra.mxu0 0.0
        %1518 = vmatprep.mubr.f32.mxu0 0.0
        %1519 = vmatmul.mubr.f32.gmra.mxu0 %v1452
        %v1520 = vpop.f32.mrf.mxu0
        %v1521 = vadd.f32 0.0, %v1520
        %v1522 = vpop.f32.mrf.mxu0
        %1523 = vdwg.mxu0
        %1524 = vrot.lane.b32.xlu0 %v383, 64
        %v1525 = vpop.permute.xlu0 %1524
        %v1528 = vsel %vm995, %v1041, 0
        %1530 = vmatprep.subr.mxu0 0.0
        %1531 = vmatpush1.msra.mxu0 0.0
        %1532 = vmatprep.subr.mxu0 0.0
        %1533 = vmatpush1.msra.mxu0 0.0
        %1534 = vmatprep.subr.mxu0 0.0
        %1535 = vmatpush1.msra.mxu0 0.0
        %1536 = vmatprep.subr.mxu0 0.0
        %1537 = vmatpush1.msra.mxu0 0.0
        %1538 = vmatprep.subr.mxu0 0.0
        %1539 = vmatpush1.msra.mxu0 0.0
        %1540 = vmatprep.subr.mxu0 0.0
        %1541 = vmatpush1.msra.mxu0 0.0
        %1542 = vmatprep.subr.mxu0 0.0
        %1543 = vmatpush1.msra.mxu0 0.0
        %1544 = vmatprep.subr.mxu0 0.0
        %1545 = vmatpush1.msra.mxu0 0.0
        %1546 = vmatprep.subr.mxu0 0.0
        %1547 = vmatpush1.msra.mxu0 0.0
        %1548 = vmatprep.subr.mxu0 0.0
        %1549 = vmatpush1.msra.mxu0 0.0
        %1550 = vmatprep.subr.mxu0 0.0
        %1551 = vmatpush1.msra.mxu0 0.0
        %1552 = vmatprep.subr.mxu0 0.0
        %1553 = vmatpush1.msra.mxu0 0.0
        %1554 = vmatprep.subr.mxu0 0.0
        %1555 = vmatpush1.msra.mxu0 0.0
        %1556 = vmatprep.subr.mxu0 0.0
        %1557 = vmatpush1.msra.mxu0 0.0
        %1558 = vmatprep.subr.mxu0 0.0
        %1559 = vmatpush1.msra.mxu0 0.0
        %1560 = vmatprep.subr.mxu0 0.0
        %1561 = vmatpush1.msra.mxu0 %v1525
        %1562 = vmatprep.subr.mxu0 0.0
        %1563 = vmatpush2.msra.mxu0 0.0
        %1564 = vmatprep.subr.mxu0 0.0
        %1565 = vmatpush2.msra.mxu0 0.0
        %1566 = vmatprep.subr.mxu0 0.0
        %1567 = vmatpush2.msra.mxu0 0.0
        %1568 = vmatprep.subr.mxu0 0.0
        %1569 = vmatpush2.msra.mxu0 0.0
        %1570 = vmatprep.subr.mxu0 0.0
        %1571 = vmatpush2.msra.mxu0 0.0
        %1572 = vmatprep.subr.mxu0 0.0
        %1573 = vmatpush2.msra.mxu0 0.0
        %1574 = vmatprep.subr.mxu0 0.0
        %1575 = vmatpush2.msra.mxu0 0.0
        %1576 = vmatprep.subr.mxu0 0.0
        %1577 = vmatpush2.msra.mxu0 0.0
        %1578 = vmatprep.subr.mxu0 0.0
        %1579 = vmatpush2.msra.mxu0 0.0
        %1580 = vmatprep.subr.mxu0 0.0
        %1581 = vmatpush2.msra.mxu0 0.0
        %1582 = vmatprep.subr.mxu0 0.0
        %1583 = vmatpush2.msra.mxu0 0.0
        %1584 = vmatprep.subr.mxu0 0.0
        %1585 = vmatpush2.msra.mxu0 0.0
        %1586 = vmatprep.subr.mxu0 0.0
        %1587 = vmatpush2.msra.mxu0 0.0
        %1588 = vmatprep.subr.mxu0 0.0
        %1589 = vmatpush2.msra.mxu0 0.0
        %1590 = vmatprep.subr.mxu0 0.0
        %1591 = vmatpush2.msra.mxu0 0.0
        %1592 = vmatprep.subr.mxu0 0.0
        %1593 = vmatpush2.msra.mxu0 0.0
        %1594 = vmatprep.mubr.f32.mxu0 0.0
        %1595 = vmatmul.mubr.f32.gmra.mxu0 %v1528
        %v1596 = vpop.f32.mrf.mxu0
        %v1597 = vadd.f32 0.0, %v1596
        %v1598 = vpop.f32.mrf.mxu0
        %1599 = vdwg.mxu0
        %1600 = vrot.lane.b32.xlu0 %v385, 64
        %v1601 = vpop.permute.xlu0 %1600
        %v1604 = vsel %vm995, %v1043, 0
        %1606 = vmatprep.subr.mxu0 0.0
        %1607 = vmatpush1.msra.mxu0 0.0
        %1608 = vmatprep.subr.mxu0 0.0
        %1609 = vmatpush1.msra.mxu0 0.0
        %1610 = vmatprep.subr.mxu0 0.0
        %1611 = vmatpush1.msra.mxu0 0.0
        %1612 = vmatprep.subr.mxu0 0.0
        %1613 = vmatpush1.msra.mxu0 0.0
        %1614 = vmatprep.subr.mxu0 0.0
        %1615 = vmatpush1.msra.mxu0 0.0
        %1616 = vmatprep.subr.mxu0 0.0
        %1617 = vmatpush1.msra.mxu0 0.0
        %1618 = vmatprep.subr.mxu0 0.0
        %1619 = vmatpush1.msra.mxu0 0.0
        %1620 = vmatprep.subr.mxu0 0.0
        %1621 = vmatpush1.msra.mxu0 0.0
        %1622 = vmatprep.subr.mxu0 0.0
        %1623 = vmatpush1.msra.mxu0 0.0
        %1624 = vmatprep.subr.mxu0 0.0
        %1625 = vmatpush1.msra.mxu0 0.0
        %1626 = vmatprep.subr.mxu0 0.0
        %1627 = vmatpush1.msra.mxu0 0.0
        %1628 = vmatprep.subr.mxu0 0.0
        %1629 = vmatpush1.msra.mxu0 0.0
        %1630 = vmatprep.subr.mxu0 0.0
        %1631 = vmatpush1.msra.mxu0 0.0
        %1632 = vmatprep.subr.mxu0 0.0
        %1633 = vmatpush1.msra.mxu0 0.0
        %1634 = vmatprep.subr.mxu0 0.0
        %1635 = vmatpush1.msra.mxu0 0.0
        %1636 = vmatprep.subr.mxu0 0.0
        %1637 = vmatpush1.msra.mxu0 %v1601
        %1638 = vmatprep.subr.mxu0 0.0
        %1639 = vmatpush2.msra.mxu0 0.0
        %1640 = vmatprep.subr.mxu0 0.0
        %1641 = vmatpush2.msra.mxu0 0.0
        %1642 = vmatprep.subr.mxu0 0.0
        %1643 = vmatpush2.msra.mxu0 0.0
        %1644 = vmatprep.subr.mxu0 0.0
        %1645 = vmatpush2.msra.mxu0 0.0
        %1646 = vmatprep.subr.mxu0 0.0
        %1647 = vmatpush2.msra.mxu0 0.0
        %1648 = vmatprep.subr.mxu0 0.0
        %1649 = vmatpush2.msra.mxu0 0.0
        %1650 = vmatprep.subr.mxu0 0.0
        %1651 = vmatpush2.msra.mxu0 0.0
        %1652 = vmatprep.subr.mxu0 0.0
        %1653 = vmatpush2.msra.mxu0 0.0
        %1654 = vmatprep.subr.mxu0 0.0
        %1655 = vmatpush2.msra.mxu0 0.0
        %1656 = vmatprep.subr.mxu0 0.0
        %1657 = vmatpush2.msra.mxu0 0.0
        %1658 = vmatprep.subr.mxu0 0.0
        %1659 = vmatpush2.msra.mxu0 0.0
        %1660 = vmatprep.subr.mxu0 0.0
        %1661 = vmatpush2.msra.mxu0 0.0
        %1662 = vmatprep.subr.mxu0 0.0
        %1663 = vmatpush2.msra.mxu0 0.0
        %1664 = vmatprep.subr.mxu0 0.0
        %1665 = vmatpush2.msra.mxu0 0.0
        %1666 = vmatprep.subr.mxu0 0.0
        %1667 = vmatpush2.msra.mxu0 0.0
        %1668 = vmatprep.subr.mxu0 0.0
        %1669 = vmatpush2.msra.mxu0 0.0
        %1670 = vmatprep.mubr.f32.mxu0 0.0
        %1671 = vmatmul.mubr.f32.gmra.mxu0 %v1604
        %v1672 = vpop.f32.mrf.mxu0
        %v1673 = vadd.f32 0.0, %v1672
        %v1674 = vpop.f32.mrf.mxu0
        %1675 = vdwg.mxu0
        %v1676 = vrcp.pop %v1046
        %v1677 = vrcp.pop %v1049
        %v1678 = vrcp.pop %v1052
        %v1679 = vrcp.pop %v1055
        %v1680 = vrcp.pop %v1058
        %v1681 = vrcp.pop %v1061
        %v1682 = vrcp.pop %v1064
        %v1683 = vrcp.pop %v1067
        %v1684 = vmul.f32 %v1141, %v1676
        %v1685 = vmul.f32 %v1217, %v1677
        %v1686 = vmul.f32 %v1293, %v1678
        %v1687 = vmul.f32 %v1369, %v1679
        %v1688 = vmul.f32 %v1445, %v1680
        %v1689 = vmul.f32 %v1521, %v1681
        %v1690 = vmul.f32 %v1597, %v1682
        %v1691 = vmul.f32 %v1673, %v1683
        %1693 = vrot.lane.b32.xlu0 %v1685, 4
        %v1694 = vpop.permute.xlu0 %1693
        %1697 = vrot.lane.b32.xlu0 %v1686, 8
        %v1698 = vpop.permute.xlu0 %1697
        %1701 = vrot.lane.b32.xlu0 %v1687, 12
        %v1702 = vpop.permute.xlu0 %1701
        %1705 = vrot.lane.b32.xlu0 %v1688, 16
        %v1706 = vpop.permute.xlu0 %1705
        %1709 = vrot.lane.b32.xlu0 %v1689, 20
        %v1710 = vpop.permute.xlu0 %1709
        %1713 = vrot.lane.b32.xlu0 %v1690, 24
        %v1714 = vpop.permute.xlu0 %1713
        %1717 = vrot.lane.b32.xlu0 %v1691, 28
        %v1718 = vpop.permute.xlu0 %1717
        %v1720 = vsel %vm388, %v1684, %v1694
        %v1721 = vsel %vm995, %v1720, %v1698
        %vm1722 = vcmask 97280
        %v1723 = vsel %vm1722, %v1721, %v1702
        %vm1724 = vcmask 130048
        %v1725 = vsel %vm1724, %v1723, %v1706
        %vm1726 = vcmask 162816
        %v1727 = vsel %vm1726, %v1725, %v1710
        %vm1728 = vcmask 195584
        %v1729 = vsel %vm1728, %v1727, %v1714
        %vm1730 = vcmask 228352
        %v1731 = vsel %vm1730, %v1729, %v1718
        %v1732 = vld [vmem:[#allocation7] sm:$0xff]
        %v1733 = vld [vmem:[#allocation7 + $0x8] sm:$0xff]
        %v1734 = vld [vmem:[#allocation7 + $0x10] sm:$0xff]
        %v1735 = vld [vmem:[#allocation7 + $0x18] sm:$0xff]
        %v1736 = vld [vmem:[%s4] sm:$0x1]
        %v1738 = vlaneseq
        %v1739 = vshrl.u32 %v1738, 7
        %v1740 = vsub.s32 0, %v1739
        %v1741 = vrot.slane %v1736, %v1740
        %v1744 = vsel %vm281, %v1731, 0
        %1746 = vmatprep.subr.mxu0 0.0
        %1747 = vmatpush1.msra.mxu0 0.0
        %1748 = vmatprep.subr.mxu0 0.0
        %1749 = vmatpush1.msra.mxu0 0.0
        %1750 = vmatprep.subr.mxu0 0.0
        %1751 = vmatpush1.msra.mxu0 0.0
        %1752 = vmatprep.subr.mxu0 0.0
        %1753 = vmatpush1.msra.mxu0 0.0
        %1754 = vmatprep.subr.mxu0 0.0
        %1755 = vmatpush1.msra.mxu0 0.0
        %1756 = vmatprep.subr.mxu0 0.0
        %1757 = vmatpush1.msra.mxu0 0.0
        %1758 = vmatprep.subr.mxu0 0.0
        %1759 = vmatpush1.msra.mxu0 0.0
        %1760 = vmatprep.subr.mxu0 0.0
        %1761 = vmatpush1.msra.mxu0 0.0
        %1762 = vmatprep.subr.mxu0 0.0
        %1763 = vmatpush1.msra.mxu0 0.0
        %1764 = vmatprep.subr.mxu0 0.0
        %1765 = vmatpush1.msra.mxu0 0.0
        %1766 = vmatprep.subr.mxu0 0.0
        %1767 = vmatpush1.msra.mxu0 0.0
        %1768 = vmatprep.subr.mxu0 0.0
        %1769 = vmatpush1.msra.mxu0 0.0
        %1770 = vmatprep.subr.mxu0 0.0
        %1771 = vmatpush1.msra.mxu0 %v1735
        %1772 = vmatprep.subr.mxu0 0.0
        %1773 = vmatpush1.msra.mxu0 %v1734
        %1774 = vmatprep.subr.mxu0 0.0
        %1775 = vmatpush1.msra.mxu0 %v1733
        %1776 = vmatprep.subr.mxu0 0.0
        %1777 = vmatpush1.msra.mxu0 %v1732
        %1778 = vmatprep.subr.mxu0 0.0
        %1779 = vmatpush2.msra.mxu0 0.0
        %1780 = vmatprep.subr.mxu0 0.0
        %1781 = vmatpush2.msra.mxu0 0.0
        %1782 = vmatprep.subr.mxu0 0.0
        %1783 = vmatpush2.msra.mxu0 0.0
        %1784 = vmatprep.subr.mxu0 0.0
        %1785 = vmatpush2.msra.mxu0 0.0
        %1786 = vmatprep.subr.mxu0 0.0
        %1787 = vmatpush2.msra.mxu0 0.0
        %1788 = vmatprep.subr.mxu0 0.0
        %1789 = vmatpush2.msra.mxu0 0.0
        %1790 = vmatprep.subr.mxu0 0.0
        %1791 = vmatpush2.msra.mxu0 0.0
        %1792 = vmatprep.subr.mxu0 0.0
        %1793 = vmatpush2.msra.mxu0 0.0
        %1794 = vmatprep.subr.mxu0 0.0
        %1795 = vmatpush2.msra.mxu0 0.0
        %1796 = vmatprep.subr.mxu0 0.0
        %1797 = vmatpush2.msra.mxu0 0.0
        %1798 = vmatprep.subr.mxu0 0.0
        %1799 = vmatpush2.msra.mxu0 0.0
        %1800 = vmatprep.subr.mxu0 0.0
        %1801 = vmatpush2.msra.mxu0 0.0
        %1802 = vmatprep.subr.mxu0 0.0
        %1803 = vmatpush2.msra.mxu0 0.0
        %1804 = vmatprep.subr.mxu0 0.0
        %1805 = vmatpush2.msra.mxu0 0.0
        %1806 = vmatprep.subr.mxu0 0.0
        %1807 = vmatpush2.msra.mxu0 0.0
        %1808 = vmatprep.subr.mxu0 0.0
        %1809 = vmatpush2.msra.mxu0 0.0
        %1810 = vmatprep.mubr.f32.mxu0 0.0
        %1811 = vmatmul.mubr.f32.gmra.mxu0 %v1744
        %v1812 = vpop.f32.mrf.mxu0
        %v1813 = vadd.f32 %v1741, %v1812
        %v1814 = vpop.f32.mrf.mxu0
        %1815 = vdwg.mxu0
        %1816 = vst.msk [vmem:[%s268] sm:$0xff] %vm281, %v1813
        %s1817 = sand.u32 %s141, 1
        %s1818 = scalar_lea.sflag [#allocation4], %s1817
        %s1819 = sand.u32 %s141, 1
        %s1820 = smul.addr %s1819, 8
        %s1821 = scalar_lea.vmem [#allocation8], %s1820
        // Predicated region
        $region53: #{tpu_custom_call.1} parent=39 // pred_check
          %p1822 = pneg %p151
        $region54: #{tpu_custom_call.1} parent=39 // pred_check_branch
          %1824 = sbr.rel (%p1822) target = $region56
        $region55: #{tpu_custom_call.1} parent=39 // pred_region
          %s1826 = ssub.s32 128, 128
          %1827 = vsyncadd %s1818, %s1826
          %s1828 = smul.addr %s23, 128
          %s1829 = scalar_lea.hbm %s5, %s1828
          %s1831 = sshll.u32 %s1821, 4
          %s1832 = int_to_ptr.vmem [resolvable:$true] %s1831
          %1834 = dma.vmem_to_hbm [thread:$0]  %s1832, 128, %s1829, %s1818
        $region56: #{tpu_custom_call.1} parent=39 // pred_fallthru
          _
      $region40: #{tpu_custom_call.1} parent=5 // pred_fallthru
        _
      %p1835 = scmp.le.s32.totalorder 2, %s18
      // Predicated region
      $region57: #{tpu_custom_call.1} parent=5 // pred_check
        %p1836 = pneg %p1835
      $region58: #{tpu_custom_call.1} parent=5 // pred_check_branch
        %1838 = sbr.rel (%p1836) target = $region60
      $region59: #{tpu_custom_call.1} parent=5 // pred_region
        %s1839 = ssub.s32 %s18, 2
        // Predicated region
        $region61: #{tpu_custom_call.1} parent=59 // pred_check
          %p1840 = pneg %p157
        $region62: #{tpu_custom_call.1} parent=59 // pred_check_branch
          %1842 = sbr.rel (%p1840) target = $region64
        $region63: #{tpu_custom_call.1} parent=59 // pred_region
          %s1843 = sand.u32 %s142, 1
          %s1844 = scalar_lea.sflag [#allocation4], %s1843
          %s1845 = sand.u32 %s142, 1
          %s1846 = smul.addr %s1845, 8
          %s1847 = scalar_lea.vmem [#allocation8], %s1846
          %1848 = dma.done %s1844, 128
        $region64: #{tpu_custom_call.1} parent=59 // pred_fallthru
          _
      $region60: #{tpu_custom_call.1} parent=5 // pred_fallthru
        _
    $region6: #{tpu_custom_call.1} parent=1 // loop_footer
      %s22 = sadd.s32 1, %s18
    $region7: #{tpu_custom_call.1} parent=1 // loop_footer_branch
      %17 = sbr.rel target = $region3
    $region8: #{tpu_custom_call.1} parent=1 // loop_exit
      _
    %1849 = vsyncpa [#allocation3], 1
    %s1850 = scalar_lea.sflag [#allocation3], 1
    %1851 = vsyncpa %s1850, 1
    %1852 = vsyncpa [#allocation6], 1
    %1853 = vsyncpa [#allocation4], 1
    %s1854 = scalar_lea.sflag [#allocation4], 1
    %1855 = vsyncpa %s1854, 1

</llo_original>
